<compile_context>
chip_gen: v7x
topology: tpu7x:2x2x1
jax: 0.10.0
libtpu: 0.0.40
codegen_flags: <defaults>
</compile_context>

<pallas_src>
import functools
import math

import numpy as np
import jax
import jax.numpy as jnp
from jax.experimental import pallas as pl
from jax.experimental.pallas import tpu as pltpu

LN_EPS = 1e-5
DEFAULT_TM = 256      # row tile (MXU-friendly on all generations)
DEFAULT_TW = 16       # windows per attention grid step
LANE = 128


def _round_up(x, m):
    return ((x + m - 1) // m) * m


def _cdiv(a, b):
    return (a + b - 1) // b


@functools.lru_cache(maxsize=1)
def _vmem_limit_bytes():
    # Generation-aware VMEM cap: ~60% of physical (v7x: ~38 MB of 64 MiB,
    # v5e/v6e: ~77 MB of 128 MiB).  Conservative 48 MB fallback.
    try:
        info_fn = getattr(pltpu, "get_tpu_info", None)
        if info_fn is not None:
            cap = int(info_fn().vmem_capacity_bytes)
            return min(int(cap * 0.6), 96 * 1024 * 1024)
    except Exception:
        pass
    return 48 * 1024 * 1024


def _pick_tm(M, desired):
    """Row tile: as large as desired, but keep >=2 grid blocks when possible
    so both v7x TensorCores get work (harmless on 1-TC v5e/v6e)."""
    tm = min(max(8, desired), _round_up(M, 8))
    if M > 8 and _round_up(M, tm) // tm < 2:
        tm = _round_up(_cdiv(M, 2), 8)
    return tm


def _pick_hidden_tile(Hp):
    if Hp <= 512:
        return Hp
    for cand in (512, 384, 256, 128):
        if Hp % cand == 0:
            return cand
    return Hp


def _largest_divisor_le(n, cap):
    cap = max(1, min(cap, n))
    for d in range(cap, 0, -1):
        if n % d == 0:
            return d
    return 1


# ---------------------------------------------------------------------------
# Kernel 1: fused LayerNorm + linear (norm1 + qkv projection), bf16 output.
# ---------------------------------------------------------------------------
def _ln_linear_kernel(x_ref, g_ref, b_ref, w_ref, bias_ref, o_ref):
    x = x_ref[...].astype(jnp.float32)
    mu = jnp.mean(x, axis=-1, keepdims=True)
    var = jnp.mean(jnp.square(x - mu), axis=-1, keepdims=True)
    xn = (x - mu) * jax.lax.rsqrt(var + LN_EPS)
    xn = xn * g_ref[...] + b_ref[...]
    y = jnp.dot(xn.astype(jnp.bfloat16), w_ref[...],
                preferred_element_type=jnp.float32) + bias_ref[...]
    o_ref[...] = y.astype(o_ref.dtype)


def ln_linear_pallas(x2d, gamma, beta, w_bf16, bias, *, out_dtype=jnp.bfloat16,
                     tm=DEFAULT_TM):
    """Returns (M, Np) with Np = round_up(N, 128); padded columns are garbage
    the caller ignores (keeps the store lane-dense and avoids a slice copy)."""
    M, C = x2d.shape
    Kw, N = w_bf16.shape
    assert Kw == C
    Np = _round_up(N, LANE)
    if Np != N:
        w_bf16 = jnp.pad(w_bf16, ((0, 0), (0, Np - N)))
        bias = jnp.pad(bias, ((0, Np - N),))
    tm = _pick_tm(M, tm)
    Mp = _round_up(M, tm)
    if Mp != M:
        x2d = jnp.pad(x2d, ((0, Mp - M), (0, 0)))
    flops = 2 * Mp * C * Np + 10 * Mp * C
    bytes_accessed = 4 * Mp * C + 2 * C * Np + 4 * Np + 8 * C + 2 * Mp * Np
    out = pl.pallas_call(
        _ln_linear_kernel,
        out_shape=jax.ShapeDtypeStruct((Mp, Np), out_dtype),
        grid_spec=pltpu.PrefetchScalarGridSpec(
            num_scalar_prefetch=0,
            grid=(Mp // tm,),
            in_specs=[
                pl.BlockSpec((tm, C), lambda i: (i, 0)),
                pl.BlockSpec((1, C), lambda i: (0, 0)),
                pl.BlockSpec((1, C), lambda i: (0, 0)),
                pl.BlockSpec((C, Np), lambda i: (0, 0)),
                pl.BlockSpec((1, Np), lambda i: (0, 0)),
            ],
            out_specs=pl.BlockSpec((tm, Np), lambda i: (i, 0)),
        ),
        compiler_params=pltpu.CompilerParams(
            dimension_semantics=("parallel",),
            vmem_limit_bytes=_vmem_limit_bytes()),
        cost_estimate=pl.CostEstimate(flops=int(flops), transcendentals=int(Mp),
                                      bytes_accessed=int(bytes_accessed)),
    )(x2d, gamma.reshape(1, C).astype(jnp.float32),
      beta.reshape(1, C).astype(jnp.float32),
      w_bf16, bias.reshape(1, Np).astype(jnp.float32))
    return out[:M]


# ---------------------------------------------------------------------------
# Kernel 2: plain matmul + bias (attention output projection).
# ---------------------------------------------------------------------------
def _linear_kernel(x_ref, w_ref, b_ref, o_ref):
    y = jnp.dot(x_ref[...], w_ref[...],
                preferred_element_type=jnp.float32) + b_ref[...]
    o_ref[...] = y.astype(o_ref.dtype)


def linear_pallas(x2d, w_bf16, bias, *, out_dtype=jnp.float32, tm=DEFAULT_TM):
    M, K = x2d.shape
    Kw, N = w_bf16.shape
    assert Kw == K
    Np = _round_up(N, LANE)
    if Np != N:
        w_bf16 = jnp.pad(w_bf16, ((0, 0), (0, Np - N)))
        bias = jnp.pad(bias, ((0, Np - N),))
    tm = _pick_tm(M, tm)
    Mp = _round_up(M, tm)
    if Mp != M:
        x2d = jnp.pad(x2d, ((0, Mp - M), (0, 0)))
    flops = 2 * Mp * K * Np
    bytes_accessed = (x2d.dtype.itemsize * Mp * K + 2 * K * Np + 4 * Np
                      + jnp.dtype(out_dtype).itemsize * Mp * Np)
    out = pl.pallas_call(
        _linear_kernel,
        out_shape=jax.ShapeDtypeStruct((Mp, Np), out_dtype),
        grid_spec=pltpu.PrefetchScalarGridSpec(
            num_scalar_prefetch=0,
            grid=(Mp // tm,),
            in_specs=[
                pl.BlockSpec((tm, K), lambda i: (i, 0)),
                pl.BlockSpec((K, Np), lambda i: (0, 0)),
                pl.BlockSpec((1, Np), lambda i: (0, 0)),
            ],
            out_specs=pl.BlockSpec((tm, Np), lambda i: (i, 0)),
        ),
        compiler_params=pltpu.CompilerParams(
            dimension_semantics=("parallel",),
            vmem_limit_bytes=_vmem_limit_bytes()),
        cost_estimate=pl.CostEstimate(flops=int(flops), transcendentals=0,
                                      bytes_accessed=int(bytes_accessed)),
    )(x2d, w_bf16, bias.reshape(1, Np).astype(jnp.float32))
    return out[:M, :N]


# ---------------------------------------------------------------------------
# Kernel 3: window attention core.  One grid step handles `tw` windows.
# qkv arrives lane-dense as (tw, N, >=3C) bf16; heads are split with static
# in-kernel slices; output is written lane-dense as (tw, N, C) bf16.
# ---------------------------------------------------------------------------
def _attn_body(qkv, bias, mask, *, scale, num_heads, head_dim):
    C = num_heads * head_dim
    outs = []
    for h in range(num_heads):
        q = qkv[:, :, h * head_dim:(h + 1) * head_dim]
        k = qkv[:, :, C + h * head_dim:C + (h + 1) * head_dim]
        v = qkv[:, :, 2 * C + h * head_dim:2 * C + (h + 1) * head_dim]
        attn = jnp.einsum('bqd,bkd->bqk', q, k,
                          preferred_element_type=jnp.float32) * scale
        attn = attn + bias[h][None, :, :]
        if mask is not None:
            attn = attn + mask
        attn = attn - jnp.max(attn, axis=-1, keepdims=True)
        e = jnp.exp(attn)
        p = e * pl.reciprocal(jnp.sum(e, axis=-1, keepdims=True), approx=True)
        outs.append(jnp.einsum('bqk,bkd->bqd', p.astype(jnp.bfloat16), v,
                               preferred_element_type=jnp.float32))
    return jnp.concatenate(outs, axis=-1)


def _attn_kernel_masked(qkv_ref, bias_ref, mask_ref, o_ref, *,
                        scale, num_heads, head_dim):
    out = _attn_body(qkv_ref[...], bias_ref[...], mask_ref[...],
                     scale=scale, num_heads=num_heads, head_dim=head_dim)
    o_ref[...] = out.astype(o_ref.dtype)


def _attn_kernel_nomask(qkv_ref, bias_ref, o_ref, *, scale, num_heads, head_dim):
    out = _attn_body(qkv_ref[...], bias_ref[...], None,
                     scale=scale, num_heads=num_heads, head_dim=head_dim)
    o_ref[...] = out.astype(o_ref.dtype)


def window_attention_pallas(qkv, bias, mask, *, scale, num_heads, c_dim,
                            tw=DEFAULT_TW):
    B_, N, Cq = qkv.shape
    hd = c_dim // num_heads
    bias = bias.astype(jnp.float32)
    common = dict(scale=scale, num_heads=num_heads, head_dim=hd)

    if mask is None:
        tw_eff = max(1, min(tw, max(1, (B_ + 1) // 2)))
        Bp = _round_up(B_, tw_eff)
        if Bp != B_:
            qkv = jnp.pad(qkv, ((0, Bp - B_), (0, 0), (0, 0)))
        kernel = functools.partial(_attn_kernel_nomask, **common)
        in_specs = [
            pl.BlockSpec((tw_eff, N, Cq), lambda i: (i, 0, 0)),
            pl.BlockSpec((num_heads, N, N), lambda i: (0, 0, 0)),
        ]
        args = (qkv, bias)
        mask_bytes = 0
    else:
        nW = mask.shape[0]
        assert B_ % nW == 0, "window count must be a multiple of the mask count"
        tw_eff = _largest_divisor_le(nW, tw)
        if B_ // tw_eff < 2:                      # keep both v7x TCs busy
            alt = _largest_divisor_le(nW, max(1, tw_eff // 2))
            if B_ // alt >= 2:
                tw_eff = alt
        Bp = B_
        n_mask_blk = nW // tw_eff
        kernel = functools.partial(_attn_kernel_masked, **common)
        in_specs = [
            pl.BlockSpec((tw_eff, N, Cq), lambda i: (i, 0, 0)),
            pl.BlockSpec((num_heads, N, N), lambda i: (0, 0, 0)),
            # mask stays (nW, N, N); modular index -> no B_/nW redundant copies
            pl.BlockSpec((tw_eff, N, N), lambda i, nb=n_mask_blk: (i % nb, 0, 0)),
        ]
        args = (qkv, bias, mask.astype(jnp.float32))
        mask_bytes = 4 * nW * N * N

    flops = 4 * Bp * num_heads * N * N * hd
    bytes_accessed = (2 * Bp * N * Cq + 2 * Bp * N * c_dim
                      + 4 * num_heads * N * N + mask_bytes)
    out = pl.pallas_call(
        kernel,
        out_shape=jax.ShapeDtypeStruct((Bp, N, c_dim), jnp.bfloat16),
        grid_spec=pltpu.PrefetchScalarGridSpec(
            num_scalar_prefetch=0,
            grid=(Bp // tw_eff,),
            in_specs=in_specs,
            out_specs=pl.BlockSpec((tw_eff, N, c_dim), lambda i: (i, 0, 0)),
        ),
        compiler_params=pltpu.CompilerParams(
            dimension_semantics=("parallel",),
            vmem_limit_bytes=_vmem_limit_bytes()),
        cost_estimate=pl.CostEstimate(
            flops=int(flops), transcendentals=int(Bp * num_heads * N * N),
            bytes_accessed=int(bytes_accessed)),
    )(*args)
    return out[:B_]


# ---------------------------------------------------------------------------
# Kernel 4: fused LayerNorm2 + MLP (fc1 -> exact GELU -> fc2) + residual add.
# Hidden dim is tiled over an "arbitrary" grid axis with a VMEM accumulator.
# ---------------------------------------------------------------------------
def _ln_mlp_kernel(x_ref, g_ref, b_ref, w1_ref, b1_ref, w2_ref, b2_ref,
                   o_ref, acc_ref):
    h_idx = pl.program_id(1)
    x = x_ref[...].astype(jnp.float32)
    mu = jnp.mean(x, axis=-1, keepdims=True)
    var = jnp.mean(jnp.square(x - mu), axis=-1, keepdims=True)
    xn = (x - mu) * jax.lax.rsqrt(var + LN_EPS)
    xn = xn * g_ref[...] + b_ref[...]
    h = jnp.dot(xn.astype(jnp.bfloat16), w1_ref[...],
                preferred_element_type=jnp.float32) + b1_ref[...]
    h = jax.nn.gelu(h, approximate=False)        # exact erf GELU (torch default)
    part = jnp.dot(h.astype(jnp.bfloat16), w2_ref[...],
                   preferred_element_type=jnp.float32)

    @pl.when(h_idx == 0)
    def _():
        acc_ref[...] = jnp.zeros_like(acc_ref)

    acc_ref[...] += part

    @pl.when(h_idx == pl.num_programs(1) - 1)
    def _():
        y = acc_ref[...] + b2_ref[...]
        c_in = x.shape[-1]
        if y.shape[-1] == c_in:                   # fused residual: x + mlp(ln2(x))
            y = y + x
        else:
            pad = jnp.zeros((x.shape[0], y.shape[-1] - c_in), jnp.float32)
            y = y + jnp.concatenate([x, pad], axis=-1)
        o_ref[...] = y.astype(o_ref.dtype)


def ln_mlp_residual_pallas(x2d, gamma, beta, w1_bf16, b1, w2_bf16, b2, *,
                           tm=DEFAULT_TM):
    M, C = x2d.shape
    Hd = w1_bf16.shape[1]
    Dout = w2_bf16.shape[1]
    assert Dout == C
    Hp = _round_up(Hd, LANE)
    Dp = _round_up(Dout, LANE)
    if Hp != Hd:     # zero-pad hidden: GELU(0)=0 and zero w2 rows -> no effect
        w1_bf16 = jnp.pad(w1_bf16, ((0, 0), (0, Hp - Hd)))
        b1 = jnp.pad(b1, ((0, Hp - Hd),))
        w2_bf16 = jnp.pad(w2_bf16, ((0, Hp - Hd), (0, 0)))
    if Dp != Dout:
        w2_bf16 = jnp.pad(w2_bf16, ((0, 0), (0, Dp - Dout)))
        b2 = jnp.pad(b2, ((0, Dp - Dout),))
    tm = _pick_tm(M, tm)
    Mp = _round_up(M, tm)
    if Mp != M:
        x2d = jnp.pad(x2d, ((0, Mp - M), (0, 0)))
    th = _pick_hidden_tile(Hp)
    flops = 2 * Mp * (C * Hp + Hp * Dp) + 10 * Mp * C
    bytes_accessed = (4 * Mp * C + 2 * (C * Hp + Hp * Dp)
                      + 4 * (Hp + Dp + 2 * C) + 4 * Mp * Dp)
    out = pl.pallas_call(
        _ln_mlp_kernel,
        out_shape=jax.ShapeDtypeStruct((Mp, Dp), jnp.float32),
        grid_spec=pltpu.PrefetchScalarGridSpec(
            num_scalar_prefetch=0,
            grid=(Mp // tm, Hp // th),
            in_specs=[
                pl.BlockSpec((tm, C), lambda i, h: (i, 0)),
                pl.BlockSpec((1, C), lambda i, h: (0, 0)),
                pl.BlockSpec((1, C), lambda i, h: (0, 0)),
                pl.BlockSpec((C, th), lambda i, h: (0, h)),
                pl.BlockSpec((1, th), lambda i, h: (0, h)),
                pl.BlockSpec((th, Dp), lambda i, h: (h, 0)),
                pl.BlockSpec((1, Dp), lambda i, h: (0, 0)),
            ],
            out_specs=pl.BlockSpec((tm, Dp), lambda i, h: (i, 0)),
            scratch_shapes=[pltpu.VMEM((tm, Dp), jnp.float32)],
        ),
        compiler_params=pltpu.CompilerParams(
            dimension_semantics=("parallel", "arbitrary"),
            vmem_limit_bytes=_vmem_limit_bytes()),
        cost_estimate=pl.CostEstimate(flops=int(flops), transcendentals=int(Mp * Hp),
                                      bytes_accessed=int(bytes_accessed)),
    )(x2d, gamma.reshape(1, C).astype(jnp.float32),
      beta.reshape(1, C).astype(jnp.float32),
      w1_bf16, b1.reshape(1, Hp).astype(jnp.float32),
      w2_bf16, b2.reshape(1, Dp).astype(jnp.float32))
    return out[:M, :Dout]


# ---------------------------------------------------------------------------
# Layout helpers (pure data movement, left to XLA).
# TODO(synk): window partition/reverse, cyclic roll and pad/crop are pure
# reshapes/permutes with no Pallas compute equivalent; XLA handles them.
# ---------------------------------------------------------------------------
def window_partition(x, ws):
    B, H, W, C = x.shape
    x = x.reshape(B, H // ws, ws, W // ws, ws, C)
    x = jnp.transpose(x, (0, 1, 3, 2, 4, 5))
    return x.reshape(-1, ws, ws, C)


def window_reverse(windows, ws, H, W):
    B = windows.shape[0] // ((H // ws) * (W // ws))
    x = windows.reshape(B, H // ws, W // ws, ws, ws, -1)
    x = jnp.transpose(x, (0, 1, 3, 2, 4, 5))
    return x.reshape(B, H, W, -1)


def compute_rel_pos_bias(params, cfg):
    ws = cfg['window_size']
    N = ws * ws
    nH = cfg['num_heads']
    bias = params['rpb_table'][cfg['rel_pos_index'].reshape(-1)]
    return bias.reshape(N, N, nH).transpose(2, 0, 1)


# ---------------------------------------------------------------------------
# SwinTransformerBlock forward (Pallas path).
# ---------------------------------------------------------------------------
def swin_block_forward(x, params, cfg):
    H, W = cfg['input_resolution']
    ws = cfg['window_size']
    shift = cfg['shift_size']
    nH = cfg['num_heads']
    B, L, C = x.shape
    assert L == H * W, 'input feature has wrong size'
    hd = C // nH
    scale = hd ** -0.5

    # Pre-cast weights to bf16 on the wrapper side (half the weight DMA; the
    # MXU consumes bf16 anyway).  Biases / LN params stay f32.
    w_qkv = params['w_qkv'].astype(jnp.bfloat16)
    w_proj = params['w_proj'].astype(jnp.bfloat16)
    w1 = params['w1'].astype(jnp.bfloat16)
    w2 = params['w2'].astype(jnp.bfloat16)

    shortcut = x

    # Fused LayerNorm1 + qkv projection (bf16 out).  LN and the qkv linear are
    # per-token maps, so they commute with the pad/roll/window permutations.
    qkv_tok = ln_linear_pallas(x.reshape(-1, C), params['g1'], params['b1'],
                               w_qkv, params['b_qkv'])
    Cq = qkv_tok.shape[-1]                     # 3C rounded up to a lane multiple
    qkv_img = qkv_tok.reshape(B, H, W, Cq)

    pad_r = (ws - W % ws) % ws
    pad_b = (ws - H % ws) % ws
    if pad_r or pad_b:
        # In the reference, pad tokens hit the qkv linear as zeros, so their
        # qkv equals the qkv bias.  Reproduce that after the fused LN+qkv.
        qkv_img = jnp.pad(qkv_img, ((0, 0), (0, pad_b), (0, pad_r), (0, 0)))
        fill = jnp.pad(params['b_qkv'], ((0, Cq - 3 * C),)).astype(qkv_img.dtype)
        rr = jnp.arange(H + pad_b)[:, None]
        cc = jnp.arange(W + pad_r)[None, :]
        valid = ((rr < H) & (cc < W))[None, :, :, None]
        qkv_img = jnp.where(valid, qkv_img, fill)
    Hp, Wp = H + pad_b, W + pad_r

    if shift > 0:
        qkv_img = jnp.roll(qkv_img, (-shift, -shift), axis=(1, 2))
    qkv_win = window_partition(qkv_img, ws).reshape(-1, ws * ws, Cq)

    bias = params.get('rel_bias')
    if bias is None:
        bias = compute_rel_pos_bias(params, cfg)
    mask = cfg['attn_mask'] if shift > 0 else None

    # Window attention core (lane-dense (win, N, C) layout, bf16 in/out).
    attn_out = window_attention_pallas(qkv_win, bias, mask,
                                       scale=scale, num_heads=nH, c_dim=C)
    B_ = attn_out.shape[0]

    # Output projection (bf16 in, f32 out -> rejoins the residual path).
    proj = linear_pallas(attn_out.reshape(-1, C), w_proj, params['b_proj'],
                         out_dtype=jnp.float32)
    proj = proj.reshape(B_, ws, ws, C)

    # window reverse / un-shift / un-pad (layout only)
    xr = window_reverse(proj, ws, Hp, Wp)
    if shift > 0:
        xr = jnp.roll(xr, (shift, shift), axis=(1, 2))
    if pad_r or pad_b:
        xr = xr[:, :H, :W, :]
    x = shortcut + xr.reshape(B, H * W, C)

    # Fused LayerNorm2 + MLP + residual add -> final block output.
    out = ln_mlp_residual_pallas(x.reshape(-1, C), params['g2'], params['b2'],
                                 w1, params['b1m'], w2, params['b2m'])
    return out.reshape(B, L, C)


# ---------------------------------------------------------------------------
# Reference forward (mirrors the PyTorch module).  `cast_bf16=True` mirrors the
# kernel's bf16 MXU operands; `cast_bf16=False` is the full-f32 math.
# ---------------------------------------------------------------------------
def ref_swin_block(x, params, cfg, *, cast_bf16):
    def mm(a, b):
        if cast_bf16:
            a = a.astype(jnp.bfloat16)
            b = b.astype(jnp.bfloat16)
        return jnp.matmul(a, b, preferred_element_type=jnp.float32)

    def ln(t, g, b):
        mu = jnp.mean(t, axis=-1, keepdims=True)
        var = jnp.mean(jnp.square(t - mu), axis=-1, keepdims=True)
        return (t - mu) * jax.lax.rsqrt(var + LN_EPS) * g + b

    H, W = cfg['input_resolution']
    ws = cfg['window_size']
    shift = cfg['shift_size']
    nH = cfg['num_heads']
    B, L, C = x.shape
    hd = C // nH
    scale = hd ** -0.5

    shortcut = x
    xn = ln(x, params['g1'], params['b1']).reshape(B, H, W, C)
    pad_r = (ws - W % ws) % ws
    pad_b = (ws - H % ws) % ws
    if pad_r or pad_b:
        xn = jnp.pad(xn, ((0, 0), (0, pad_b), (0, pad_r), (0, 0)))
    Hp, Wp = H + pad_b, W + pad_r
    xs = jnp.roll(xn, (-shift, -shift), axis=(1, 2)) if shift > 0 else xn
    xw = window_partition(xs, ws).reshape(-1, ws * ws, C)
    B_, N, _ = xw.shape

    qkv = mm(xw, params['w_qkv']) + params['b_qkv']
    qkv = qkv.reshape(B_, N, 3, nH, hd).transpose(2, 0, 3, 1, 4)
    q, k, v = qkv[0], qkv[1], qkv[2]
    attn = mm(q, jnp.swapaxes(k, -2, -1)) * scale   # == (q*scale) @ k^T
    bias = params['rpb_table'][cfg['rel_pos_index'].reshape(-1)]
    bias = bias.reshape(N, N, nH).transpose(2, 0, 1)
    attn = attn + bias[None]
    if shift > 0:
        nW = cfg['attn_mask'].shape[0]
        attn = attn.reshape(B_ // nW, nW, nH, N, N) + cfg['attn_mask'][None, :, None]
        attn = attn.reshape(B_, nH, N, N)
    attn = attn - jnp.max(attn, axis=-1, keepdims=True)
    attn = jnp.exp(attn)
    attn = attn / jnp.sum(attn, axis=-1, keepdims=True)
    out = mm(attn, v)
    out = out.transpose(0, 2, 1, 3).reshape(B_, N, C)
    out = mm(out, params['w_proj']) + params['b_proj']
    out = out.reshape(B_, ws, ws, C)
    xr = window_reverse(out, ws, Hp, Wp)
    if shift > 0:
        xr = jnp.roll(xr, (shift, shift), axis=(1, 2))
    xr = xr[:, :H, :W, :].reshape(B, L, C)
    x = shortcut + xr
    h = mm(ln(x, params['g2'], params['b2']), params['w1']) + params['b1m']
    h = jax.nn.gelu(h, approximate=False)
    y = mm(h, params['w2']) + params['b2m']
    return x + y


# ---------------------------------------------------------------------------
# Config (buffers) and parameter init.
# ---------------------------------------------------------------------------
def make_swin_config(dim, input_resolution, num_heads, window_size, shift_size,
                     mlp_ratio):
    if min(input_resolution) <= window_size:
        shift_size = 0
        window_size = min(input_resolution)
    assert 0 <= shift_size < window_size
    ws = window_size
    cfg = dict(dim=dim, input_resolution=input_resolution, num_heads=num_heads,
               window_size=ws, shift_size=shift_size, mlp_ratio=mlp_ratio)

    # relative_position_index (same construction as the PyTorch module)
    coords = np.stack(np.meshgrid(np.arange(ws), np.arange(ws), indexing='ij'))
    coords_flat = coords.reshape(2, -1)
    rel = coords_flat[:, :, None] - coords_flat[:, None, :]
    rel = rel.transpose(1, 2, 0).copy()
    rel[:, :, 0] += ws - 1
    rel[:, :, 1] += ws - 1
    rel[:, :, 0] *= 2 * ws - 1
    cfg['rel_pos_index'] = jnp.asarray(rel.sum(-1), jnp.int32)

    # attention mask for shifted windows (built on the unpadded resolution,
    # exactly like the PyTorch __init__)
    if shift_size > 0:
        H, W = input_resolution
        img_mask = np.zeros((1, H, W, 1), np.float32)
        h_slices = (slice(0, -ws), slice(-ws, -shift_size), slice(-shift_size, None))
        w_slices = (slice(0, -ws), slice(-ws, -shift_size), slice(-shift_size, None))
        cnt = 0
        for h in h_slices:
            for w in w_slices:
                img_mask[:, h, w, :] = cnt
                cnt += 1
        mw = img_mask.reshape(1, H // ws, ws, W // ws, ws, 1)
        mw = mw.transpose(0, 1, 3, 2, 4, 5).reshape(-1, ws * ws)
        am = mw[:, None, :] - mw[:, :, None]
        am = np.where(am != 0, -100.0, 0.0).astype(np.float32)
        cfg['attn_mask'] = jnp.asarray(am)
    else:
        cfg['attn_mask'] = None
    return cfg


def init_swin_params(key, dim, num_heads, window_size, mlp_ratio):
    hidden = int(dim * mlp_ratio)
    ws = window_size
    ks = jax.random.split(key, 13)

    def unif(k, shape, fan_in):
        bound = 1.0 / math.sqrt(fan_in)
        return jax.random.uniform(k, shape, jnp.float32, -bound, bound)

    return dict(
        g1=1.0 + 0.1 * jax.random.normal(ks[0], (dim,), jnp.float32),
        b1=0.1 * jax.random.normal(ks[1], (dim,), jnp.float32),
        w_qkv=unif(ks[2], (dim, 3 * dim), dim),        # stored transposed vs torch
        b_qkv=unif(ks[3], (3 * dim,), dim),
        w_proj=unif(ks[4], (dim, dim), dim),
        b_proj=unif(ks[5], (dim,), dim),
        rpb_table=0.02 * jax.random.truncated_normal(
            ks[6], -2.0, 2.0, ((2 * ws - 1) * (2 * ws - 1), num_heads), jnp.float32),
        g2=1.0 + 0.1 * jax.random.normal(ks[7], (dim,), jnp.float32),
        b2=0.1 * jax.random.normal(ks[8], (dim,), jnp.float32),
        w1=unif(ks[9], (dim, hidden), dim),
        b1m=unif(ks[10], (hidden,), dim),
        w2=unif(ks[11], (hidden, dim), hidden),
        b2m=unif(ks[12], (dim,), hidden),
    )


if __name__ == "__main__":
    key = jax.random.PRNGKey(0)
    dim = 32
    num_heads = 4
    window_size = 8
    mlp_ratio = 4.0
    B = 2

    k_x, k_p = jax.random.split(key)

    test_cases = [
        ((16, 16), 0),   # regular windows (no mask)
        ((16, 16), 4),   # shifted windows (masked attention)
        ((12, 12), 0),   # non-divisible resolution -> padding path
    ]
    for input_resolution, shift_size in test_cases:
        L = input_resolution[0] * input_resolution[1]
        x = jax.random.normal(k_x, (B, L, dim), jnp.float32)
        cfg = make_swin_config(dim, input_resolution, num_heads, window_size,
                               shift_size, mlp_ratio)
        params = init_swin_params(k_p, dim, num_heads, cfg['window_size'], mlp_ratio)
        params['rel_bias'] = compute_rel_pos_bias(params, cfg)  # hoisted gather

        y = swin_block_forward(x, params, cfg)
        y = jax.block_until_ready(y)
        assert y.shape == (B, L, dim)
        assert bool(jnp.all(jnp.isfinite(y)))

        # Implementation check vs a reference with identical bf16 MXU operands
        # (only remaining delta: EUP approx reciprocal in the softmax).
        ref_b = ref_swin_block(x, params, cfg, cast_bf16=True)
        err_b = float(jnp.max(jnp.abs(y - ref_b)))
        assert jnp.allclose(y, ref_b, atol=2e-2, rtol=2e-2), \
            f"bf16-matched mismatch {input_resolution}, shift={shift_size}: {err_b}"
        # Semantics check vs full-f32 math (bf16 operands => looser tolerance).
        ref_f = ref_swin_block(x, params, cfg, cast_bf16=False)
        err_f = float(jnp.max(jnp.abs(y - ref_f)))
        assert jnp.allclose(y, ref_f, atol=1e-1, rtol=1e-1), \
            f"f32 semantics mismatch {input_resolution}, shift={shift_size}: {err_f}"

    print("KERNEL_OK")
</pallas_src>

<mosaic_0001>
module attributes {stable_mosaic.version = 11 : i64} {
  func.func @_ln_linear_kernel(%arg0: i32, %arg1: memref<256x32xf32, #tpu.memory_space<vmem>>, %arg2: memref<1x32xf32, #tpu.memory_space<vmem>>, %arg3: memref<1x32xf32, #tpu.memory_space<vmem>>, %arg4: memref<32x128xbf16, #tpu.memory_space<vmem>>, %arg5: memref<1x128xf32, #tpu.memory_space<vmem>>, %arg6: memref<256x128xbf16, #tpu.memory_space<vmem>>) attributes {dimension_semantics = [#tpu.dimension_semantics<parallel>], iteration_bounds = array<i64: 2>, scalar_prefetch = 0 : i64, scratch_operands = 0 : i64, tpu.core_type = #tpu.core_type<tc>, window_params = [{transform_indices = @transform_0, window_bounds = array<i64: 256, 32>}, {pipeline_mode = #tpu.pipeline_mode<synchronous>, transform_indices = @transform_1, window_bounds = array<i64: 1, 32>}, {pipeline_mode = #tpu.pipeline_mode<synchronous>, transform_indices = @transform_2, window_bounds = array<i64: 1, 32>}, {pipeline_mode = #tpu.pipeline_mode<synchronous>, transform_indices = @transform_3, window_bounds = array<i64: 32, 128>}, {pipeline_mode = #tpu.pipeline_mode<synchronous>, transform_indices = @transform_4, window_bounds = array<i64: 1, 128>}, {transform_indices = @transform_5, window_bounds = array<i64: 256, 128>}]} {
    %c0 = arith.constant 0 : index
    %c0_0 = arith.constant 0 : index
    %0 = vector.load %arg1[%c0, %c0_0] : memref<256x32xf32, #tpu.memory_space<vmem>>, vector<256x32xf32>
    %cst = arith.constant dense<0.000000e+00> : vector<256xf32>
    %1 = vector.multi_reduction <add>, %0, %cst [1] : vector<256x32xf32> to vector<256xf32>
    %2 = vector.shape_cast %1 : vector<256xf32> to vector<256x1xf32>
    %cst_1 = arith.constant 3.200000e+01 : f32
    %3 = vector.broadcast %cst_1 : f32 to vector<256x1xf32>
    %4 = arith.divf %2, %3 : vector<256x1xf32>
    %5 = vector.broadcast %4 : vector<256x1xf32> to vector<256x32xf32>
    %6 = arith.subf %0, %5 : vector<256x32xf32>
    %7 = arith.mulf %6, %6 : vector<256x32xf32>
    %cst_2 = arith.constant dense<0.000000e+00> : vector<256xf32>
    %8 = vector.multi_reduction <add>, %7, %cst_2 [1] : vector<256x32xf32> to vector<256xf32>
    %9 = vector.shape_cast %8 : vector<256xf32> to vector<256x1xf32>
    %cst_3 = arith.constant 3.200000e+01 : f32
    %10 = vector.broadcast %cst_3 : f32 to vector<256x1xf32>
    %11 = arith.divf %9, %10 : vector<256x1xf32>
    %12 = vector.broadcast %4 : vector<256x1xf32> to vector<256x32xf32>
    %13 = arith.subf %0, %12 : vector<256x32xf32>
    %cst_4 = arith.constant 9.99999974E-6 : f32
    %14 = vector.broadcast %cst_4 : f32 to vector<256x1xf32>
    %15 = arith.addf %11, %14 : vector<256x1xf32>
    %16 = math.rsqrt %15 : vector<256x1xf32>
    %17 = vector.broadcast %16 : vector<256x1xf32> to vector<256x32xf32>
    %18 = arith.mulf %13, %17 : vector<256x32xf32>
    %c0_5 = arith.constant 0 : index
    %c0_6 = arith.constant 0 : index
    %19 = vector.load %arg2[%c0_5, %c0_6] : memref<1x32xf32, #tpu.memory_space<vmem>>, vector<1x32xf32>
    %20 = vector.broadcast %19 : vector<1x32xf32> to vector<256x32xf32>
    %21 = arith.mulf %18, %20 : vector<256x32xf32>
    %c0_7 = arith.constant 0 : index
    %c0_8 = arith.constant 0 : index
    %22 = vector.load %arg3[%c0_7, %c0_8] : memref<1x32xf32, #tpu.memory_space<vmem>>, vector<1x32xf32>
    %23 = vector.broadcast %22 : vector<1x32xf32> to vector<256x32xf32>
    %24 = arith.addf %21, %23 : vector<256x32xf32>
    %25 = arith.truncf %24 : vector<256x32xf32> to vector<256x32xbf16>
    %c0_9 = arith.constant 0 : index
    %c0_10 = arith.constant 0 : index
    %26 = vector.load %arg4[%c0_9, %c0_10] : memref<32x128xbf16, #tpu.memory_space<vmem>>, vector<32x128xbf16>
    %cst_11 = arith.constant dense<0.000000e+00> : vector<256x128xf32>
    %27 = tpu.matmul %25, %26, %cst_11 {dimension_numbers = #tpu.dot_dimension_numbers<[1], [0], [0], [1], [0, 0, 1, 1], [], []>} : vector<256x32xbf16>, vector<32x128xbf16>, vector<256x128xf32> -> vector<256x128xf32>
    %c0_12 = arith.constant 0 : index
    %c0_13 = arith.constant 0 : index
    %28 = vector.load %arg5[%c0_12, %c0_13] : memref<1x128xf32, #tpu.memory_space<vmem>>, vector<1x128xf32>
    %29 = vector.broadcast %28 : vector<1x128xf32> to vector<256x128xf32>
    %30 = arith.addf %27, %29 : vector<256x128xf32>
    %31 = arith.truncf %30 : vector<256x128xf32> to vector<256x128xbf16>
    %c0_14 = arith.constant 0 : index
    %c0_15 = arith.constant 0 : index
    %32 = vector.load %arg6[%c0_14, %c0_15] : memref<256x128xbf16, #tpu.memory_space<vmem>>, vector<256x128xbf16>
    tpu.vector_store %arg6[%c0_14, %c0_15], %31 {strides = array<i32>} : memref<256x128xbf16, #tpu.memory_space<vmem>>, vector<256x128xbf16>,
    return
  }
  func.func @transform_0(%arg0: i32) -> (i32, i32) {
    %c0_i32 = arith.constant 0 : i32
    %c0_i32_0 = arith.constant 0 : i32
    return %arg0, %c0_i32 : i32, i32
  }
  func.func @transform_1(%arg0: i32) -> (i32, i32) {
    %c0_i32 = arith.constant 0 : i32
    %c0_i32_0 = arith.constant 0 : i32
    %c0_i32_1 = arith.constant 0 : i32
    return %c0_i32, %c0_i32_0 : i32, i32
  }
  func.func @transform_2(%arg0: i32) -> (i32, i32) {
    %c0_i32 = arith.constant 0 : i32
    %c0_i32_0 = arith.constant 0 : i32
    %c0_i32_1 = arith.constant 0 : i32
    return %c0_i32, %c0_i32_0 : i32, i32
  }
  func.func @transform_3(%arg0: i32) -> (i32, i32) {
    %c0_i32 = arith.constant 0 : i32
    %c0_i32_0 = arith.constant 0 : i32
    %c0_i32_1 = arith.constant 0 : i32
    return %c0_i32, %c0_i32_0 : i32, i32
  }
  func.func @transform_4(%arg0: i32) -> (i32, i32) {
    %c0_i32 = arith.constant 0 : i32
    %c0_i32_0 = arith.constant 0 : i32
    %c0_i32_1 = arith.constant 0 : i32
    return %c0_i32, %c0_i32_0 : i32, i32
  }
  func.func @transform_5(%arg0: i32) -> (i32, i32) {
    %c0_i32 = arith.constant 0 : i32
    %c0_i32_0 = arith.constant 0 : i32
    return %arg0, %c0_i32 : i32, i32
  }
}

</mosaic_0001>

<llo_original>
// kernel: tpu_custom_call.1
$region0: #{tpu_custom_call.1}
  #allocation0 [shape = 'u32[]', space=smem, size = 0x4, offset = 0x4, fixed_abs, tag = 'smem constant byte address 0x4 - core index']
  #allocation1 [shape = 'u32[144,128]{1,0:T(1,128)}', space=vmem, size = 0x12000, scoped, tag = 'internal scratch']
  %s0 = inlined_call_operand.vmem [shape: f32[512,32], index: 0, kind: input, shape index: {}]
  %s1 = inlined_call_operand.vmem [shape: f32[1,32], index: 1, kind: input, shape index: {}]
  %s2 = inlined_call_operand.vmem [shape: f32[1,32], index: 2, kind: input, shape index: {}]
  %s3 = inlined_call_operand.vmem [shape: bf16[32,128], index: 3, kind: input, shape index: {}]
  %s4 = inlined_call_operand.vmem [shape: f32[1,128], index: 4, kind: input, shape index: {}]
  %s5 = inlined_call_operand.hbm [shape: bf16[512,128], index: 5, kind: output, shape index: {}]
  %s6 = sld [smem:[#allocation0]]
  $region53: #{tpu_custom_call.1} parent=0
    _
  %s8 = ssub.s32 1, %s6
  %s9 = scalar_select 0, %s8, %s6
  $region1: #{tpu_custom_call.1} parent=0
    #allocation2 [shape = 'u8[131072]{0}', space=vmem, size = 0x20000, scoped, tag = 'output window, operand 0']
    #allocation3 [shape = 's32[2]{0}', space=sflag, size = 0x8, scoped, tag = 'scoped memory for tpu_custom_call.1']
    %10 = vsyncpa [#allocation3], 0
    %s11 = scalar_lea.sflag [#allocation3], 1
    %12 = vsyncpa %s11, 0
    loop: start=0, step=1, limit=4
    $region2: #{tpu_custom_call.1} parent=1 // loop_pre_header
      _
    $region3: #{tpu_custom_call.1} parent=1 // loop_header
      %s14 = sphi 0, %s18
      %p15 = scmp.ge.s32.totalorder %s14, 4
      %s24 = sphi 0, %s26
      %s27 = sphi 0, %s24
      %s28 = sphi 0, %s27
      %s44 = sphi 0, %s28
      %s48 = sphi 0, %s48
      %s50 = sphi 0, %s48
      %s51 = sphi 0, %s50
      %s65 = sphi 0, %s51
      %s69 = sphi 0, %s69
      %s71 = sphi 0, %s69
      %s72 = sphi 0, %s71
      %s86 = sphi 0, %s72
      %s90 = sphi 0, %s90
      %s92 = sphi 0, %s90
      %s93 = sphi 0, %s92
      %s107 = sphi 0, %s93
      %s111 = sphi 0, %s111
      %s113 = sphi 0, %s111
      %s114 = sphi 0, %s113
      %s128 = sphi 0, %s114
      %s134 = sphi 0, %s136
      %s137 = sphi 0, %s134
      %s138 = sphi 0, %s137
      %s154 = sphi 0, %s138
    $region4: #{tpu_custom_call.1} parent=1 // loop_header_branch
      %17 = sbr.rel (%p15) target = $region8
    $region5: #{tpu_custom_call.1} parent=1 // loop_body
      %s19 = ssub.s32 %s14, 1
      %s20 = ssub.s32 %s14, 2
      %s21 = sadd.s32 %s14, 1
      %s22 = ssub.s32 %s14, %s21
      %p23 = scmp.eq.s32.totalorder %s22, 0
      %s25 = sadd.s32 %s24, 1
      %s26 = scalar_select %p23, %s24, %s25
      %p29 = pneg %p23
      %p30 = scmp.eq.s32.totalorder %s14, 1
      %p31 = por %p29, %p30
      %p32 = scmp.ne.s32.totalorder %s24, %s27
      %p33 = scmp.eq.s32.totalorder %s14, 0
      %p34 = por %p32, %p33
      %p35 = scmp.ne.s32.totalorder %s24, %s27
      %p36 = scmp.eq.s32.totalorder %s19, 1
      %p37 = por %p35, %p36
      %p38 = scmp.ne.s32.totalorder %s27, %s28
      %p39 = scmp.eq.s32.totalorder %s19, 0
      %p40 = por %p38, %p39
      %p41 = scmp.ne.s32.totalorder %s27, %s28
      %p42 = scmp.eq.s32.totalorder %s20, 1
      %p43 = por %p41, %p42
      %p45 = scmp.ne.s32.totalorder %s28, %s44
      %p46 = scmp.eq.s32.totalorder %s20, 0
      %p47 = por %p45, %p46
      %s49 = sadd.s32 %s48, 1
      %p52 = scmp.eq.s32.totalorder %s14, 1
      %p53 = scmp.ne.s32.totalorder %s48, %s50
      %p54 = scmp.eq.s32.totalorder %s14, 0
      %p55 = por %p53, %p54
      %p56 = scmp.ne.s32.totalorder %s48, %s50
      %p57 = scmp.eq.s32.totalorder %s19, 1
      %p58 = por %p56, %p57
      %p59 = scmp.ne.s32.totalorder %s50, %s51
      %p60 = scmp.eq.s32.totalorder %s19, 0
      %p61 = por %p59, %p60
      %p62 = scmp.ne.s32.totalorder %s50, %s51
      %p63 = scmp.eq.s32.totalorder %s20, 1
      %p64 = por %p62, %p63
      %p66 = scmp.ne.s32.totalorder %s51, %s65
      %p67 = scmp.eq.s32.totalorder %s20, 0
      %p68 = por %p66, %p67
      %s70 = sadd.s32 %s69, 1
      %p73 = scmp.eq.s32.totalorder %s14, 1
      %p74 = scmp.ne.s32.totalorder %s69, %s71
      %p75 = scmp.eq.s32.totalorder %s14, 0
      %p76 = por %p74, %p75
      %p77 = scmp.ne.s32.totalorder %s69, %s71
      %p78 = scmp.eq.s32.totalorder %s19, 1
      %p79 = por %p77, %p78
      %p80 = scmp.ne.s32.totalorder %s71, %s72
      %p81 = scmp.eq.s32.totalorder %s19, 0
      %p82 = por %p80, %p81
      %p83 = scmp.ne.s32.totalorder %s71, %s72
      %p84 = scmp.eq.s32.totalorder %s20, 1
      %p85 = por %p83, %p84
      %p87 = scmp.ne.s32.totalorder %s72, %s86
      %p88 = scmp.eq.s32.totalorder %s20, 0
      %p89 = por %p87, %p88
      %s91 = sadd.s32 %s90, 1
      %p94 = scmp.eq.s32.totalorder %s14, 1
      %p95 = scmp.ne.s32.totalorder %s90, %s92
      %p96 = scmp.eq.s32.totalorder %s14, 0
      %p97 = por %p95, %p96
      %p98 = scmp.ne.s32.totalorder %s90, %s92
      %p99 = scmp.eq.s32.totalorder %s19, 1
      %p100 = por %p98, %p99
      %p101 = scmp.ne.s32.totalorder %s92, %s93
      %p102 = scmp.eq.s32.totalorder %s19, 0
      %p103 = por %p101, %p102
      %p104 = scmp.ne.s32.totalorder %s92, %s93
      %p105 = scmp.eq.s32.totalorder %s20, 1
      %p106 = por %p104, %p105
      %p108 = scmp.ne.s32.totalorder %s93, %s107
      %p109 = scmp.eq.s32.totalorder %s20, 0
      %p110 = por %p108, %p109
      %s112 = sadd.s32 %s111, 1
      %p115 = scmp.eq.s32.totalorder %s14, 1
      %p116 = scmp.ne.s32.totalorder %s111, %s113
      %p117 = scmp.eq.s32.totalorder %s14, 0
      %p118 = por %p116, %p117
      %p119 = scmp.ne.s32.totalorder %s111, %s113
      %p120 = scmp.eq.s32.totalorder %s19, 1
      %p121 = por %p119, %p120
      %p122 = scmp.ne.s32.totalorder %s113, %s114
      %p123 = scmp.eq.s32.totalorder %s19, 0
      %p124 = por %p122, %p123
      %p125 = scmp.ne.s32.totalorder %s113, %s114
      %p126 = scmp.eq.s32.totalorder %s20, 1
      %p127 = por %p125, %p126
      %p129 = scmp.ne.s32.totalorder %s114, %s128
      %p130 = scmp.eq.s32.totalorder %s20, 0
      %p131 = por %p129, %p130
      %s132 = ssub.s32 %s14, %s21
      %p133 = scmp.eq.s32.totalorder %s132, 0
      %s135 = sadd.s32 %s134, 1
      %s136 = scalar_select %p133, %s134, %s135
      %p139 = pneg %p133
      %p140 = scmp.eq.s32.totalorder %s14, 1
      %p141 = por %p139, %p140
      %p142 = scmp.ne.s32.totalorder %s134, %s137
      %p143 = scmp.eq.s32.totalorder %s14, 0
      %p144 = por %p142, %p143
      %p145 = scmp.ne.s32.totalorder %s134, %s137
      %p146 = scmp.eq.s32.totalorder %s19, 1
      %p147 = por %p145, %p146
      %p148 = scmp.ne.s32.totalorder %s137, %s138
      %p149 = scmp.eq.s32.totalorder %s19, 0
      %p150 = por %p148, %p149
      %p151 = scmp.ne.s32.totalorder %s137, %s138
      %p152 = scmp.eq.s32.totalorder %s20, 1
      %p153 = por %p151, %p152
      %p155 = scmp.ne.s32.totalorder %s138, %s154
      %p156 = scmp.eq.s32.totalorder %s20, 0
      %p157 = por %p155, %p156
      %p158 = scmp.le.s32.totalorder 1, %s14
      %p159 = scmp.lt.s32.totalorder %s14, 3
      %p160 = pnand %p158, %p159
      %p161 = pneg %p160
      // Predicated region
      $region9: #{tpu_custom_call.1} parent=5 // pred_check
        _
      $region10: #{tpu_custom_call.1} parent=5 // pred_check_branch
        %163 = sbr.rel (%p160) target = $region12
      $region11: #{tpu_custom_call.1} parent=5 // pred_region
        %s164 = ssub.s32 %s14, 1
        // Predicated region
        $region13: #{tpu_custom_call.1} parent=11 // pred_check
          %p165 = pneg %p61
        $region14: #{tpu_custom_call.1} parent=11 // pred_check_branch
          %167 = sbr.rel (%p165) target = $region16
        $region15: #{tpu_custom_call.1} parent=11 // pred_region
          _
        $region16: #{tpu_custom_call.1} parent=11 // pred_fallthru
          _
        // Predicated region
        $region17: #{tpu_custom_call.1} parent=11 // pred_check
          %p168 = pneg %p82
        $region18: #{tpu_custom_call.1} parent=11 // pred_check_branch
          %170 = sbr.rel (%p168) target = $region20
        $region19: #{tpu_custom_call.1} parent=11 // pred_region
          _
        $region20: #{tpu_custom_call.1} parent=11 // pred_fallthru
          _
        // Predicated region
        $region21: #{tpu_custom_call.1} parent=11 // pred_check
          %p171 = pneg %p103
        $region22: #{tpu_custom_call.1} parent=11 // pred_check_branch
          %173 = sbr.rel (%p171) target = $region24
        $region23: #{tpu_custom_call.1} parent=11 // pred_region
          _
        $region24: #{tpu_custom_call.1} parent=11 // pred_fallthru
          _
        // Predicated region
        $region25: #{tpu_custom_call.1} parent=11 // pred_check
          %p174 = pneg %p124
        $region26: #{tpu_custom_call.1} parent=11 // pred_check_branch
          %176 = sbr.rel (%p174) target = $region28
        $region27: #{tpu_custom_call.1} parent=11 // pred_region
          _
        $region28: #{tpu_custom_call.1} parent=11 // pred_fallthru
          _
      $region12: #{tpu_custom_call.1} parent=5 // pred_fallthru
        _
      %p177 = scmp.lt.s32.totalorder %s14, 2
      // Predicated region
      $region29: #{tpu_custom_call.1} parent=5 // pred_check
        %p178 = pneg %p177
      $region30: #{tpu_custom_call.1} parent=5 // pred_check_branch
        %180 = sbr.rel (%p178) target = $region32
      $region31: #{tpu_custom_call.1} parent=5 // pred_region
        // Predicated region
        $region33: #{tpu_custom_call.1} parent=31 // pred_check
          %p181 = pneg %p34
        $region34: #{tpu_custom_call.1} parent=31 // pred_check_branch
          %183 = sbr.rel (%p181) target = $region36
        $region35: #{tpu_custom_call.1} parent=31 // pred_region
          %s184 = smul.u32 32, %s14
          %p185 = scmp.lt.s32.totalorder %s184, 63
          %s186 = scalar_select %p185, %s184, 63
          %s187 = smul.addr %s186, 8
          %s188 = scalar_lea.vmem %s0, %s187
          %s189 = smul.u32 32, %s14
        $region36: #{tpu_custom_call.1} parent=31 // pred_fallthru
          _
      $region32: #{tpu_custom_call.1} parent=5 // pred_fallthru
        _
      %p190 = scmp.le.s32.totalorder 1, %s14
      %p191 = scmp.lt.s32.totalorder %s14, 3
      %p192 = pnand %p190, %p191
      %p193 = pneg %p192
      // Predicated region
      $region37: #{tpu_custom_call.1} parent=5 // pred_check
        _
      $region38: #{tpu_custom_call.1} parent=5 // pred_check_branch
        %195 = sbr.rel (%p192) target = $region40
      $region39: #{tpu_custom_call.1} parent=5 // pred_region
        %s196 = ssub.s32 %s14, 1
        %s197 = smul.u32 32, %s19
        %p198 = scmp.lt.s32.totalorder %s197, 63
        %s199 = scalar_select %p198, %s197, 63
        %s200 = smul.addr %s199, 8
        %s201 = scalar_lea.vmem %s0, %s200
        %p202 = pneg %p40
        %p203 = pneg %p37
        %p204 = pneg %p61
        %p205 = pneg %p58
        %p206 = pneg %p82
        %p207 = pneg %p79
        %p208 = pneg %p103
        %p209 = pneg %p100
        %p210 = pneg %p124
        %p211 = pneg %p121
        %p212 = pneg %p150
        %p213 = pneg %p147
        %s214 = sand.u32 %s137, 1
        %s215 = scalar_lea.sflag [#allocation3], %s214
        %s216 = sand.u32 %s137, 1
        %s217 = smul.addr %s216, 128
        %s218 = scalar_lea.vmem [#allocation2], %s217
        %s219 = smul.u32 32, %s19
        %p220 = scmp.lt.s32.totalorder %s219, 63
        %s221 = scalar_select %p220, %s219, 63
        %s222 = smul.addr %s221, 8
        %s223 = scalar_lea.vmem %s0, %s222
        %s224 = smul.u32 32, %s19
        %s225 = smul.u32 32, %s19
        %v227 = vld [vmem:[%s223] sm:$0xff]
        %v228 = vld [vmem:[%s223 + $0x8] sm:$0xff]
        %v229 = vld [vmem:[%s223 + $0x10] sm:$0xff]
        %v230 = vld [vmem:[%s223 + $0x18] sm:$0xff]
        %v231 = vld [vmem:[%s223 + $0x20] sm:$0xff]
        %v232 = vld [vmem:[%s223 + $0x28] sm:$0xff]
        %v233 = vld [vmem:[%s223 + $0x30] sm:$0xff]
        %v234 = vld [vmem:[%s223 + $0x38] sm:$0xff]
        %v235 = vld [vmem:[%s223 + $0x40] sm:$0xff]
        %v236 = vld [vmem:[%s223 + $0x48] sm:$0xff]
        %v237 = vld [vmem:[%s223 + $0x50] sm:$0xff]
        %v238 = vld [vmem:[%s223 + $0x58] sm:$0xff]
        %v239 = vld [vmem:[%s223 + $0x60] sm:$0xff]
        %v240 = vld [vmem:[%s223 + $0x68] sm:$0xff]
        %v241 = vld [vmem:[%s223 + $0x70] sm:$0xff]
        %v242 = vld [vmem:[%s223 + $0x78] sm:$0xff]
        %v243 = vld [vmem:[%s223 + $0x80] sm:$0xff]
        %v244 = vld [vmem:[%s223 + $0x88] sm:$0xff]
        %v245 = vld [vmem:[%s223 + $0x90] sm:$0xff]
        %v246 = vld [vmem:[%s223 + $0x98] sm:$0xff]
        %v247 = vld [vmem:[%s223 + $0xa0] sm:$0xff]
        %v248 = vld [vmem:[%s223 + $0xa8] sm:$0xff]
        %v249 = vld [vmem:[%s223 + $0xb0] sm:$0xff]
        %v250 = vld [vmem:[%s223 + $0xb8] sm:$0xff]
        %v251 = vld [vmem:[%s223 + $0xc0] sm:$0xff]
        %v252 = vld [vmem:[%s223 + $0xc8] sm:$0xff]
        %v253 = vld [vmem:[%s223 + $0xd0] sm:$0xff]
        %v254 = vld [vmem:[%s223 + $0xd8] sm:$0xff]
        %v255 = vld [vmem:[%s223 + $0xe0] sm:$0xff]
        %v256 = vld [vmem:[%s223 + $0xe8] sm:$0xff]
        %v257 = vld [vmem:[%s223 + $0xf0] sm:$0xff]
        %v258 = vld [vmem:[%s223 + $0xf8] sm:$0xff]
        %vm259 = vcmask 261120
        %v260 = vsel %vm259, %v227, 0.0
        %261 = vadd.xlane.f32.xlu0 %v260
        %v262 = vpop.xlane.xlu0 %261
        %v263 = vsel %vm259, %v228, 0.0
        %264 = vadd.xlane.f32.xlu0 %v263
        %v265 = vpop.xlane.xlu0 %264
        %v266 = vsel %vm259, %v229, 0.0
        %267 = vadd.xlane.f32.xlu0 %v266
        %v268 = vpop.xlane.xlu0 %267
        %v269 = vsel %vm259, %v230, 0.0
        %270 = vadd.xlane.f32.xlu0 %v269
        %v271 = vpop.xlane.xlu0 %270
        %v272 = vsel %vm259, %v231, 0.0
        %273 = vadd.xlane.f32.xlu0 %v272
        %v274 = vpop.xlane.xlu0 %273
        %v275 = vsel %vm259, %v232, 0.0
        %276 = vadd.xlane.f32.xlu0 %v275
        %v277 = vpop.xlane.xlu0 %276
        %v278 = vsel %vm259, %v233, 0.0
        %279 = vadd.xlane.f32.xlu0 %v278
        %v280 = vpop.xlane.xlu0 %279
        %v281 = vsel %vm259, %v234, 0.0
        %282 = vadd.xlane.f32.xlu0 %v281
        %v283 = vpop.xlane.xlu0 %282
        %v284 = vsel %vm259, %v235, 0.0
        %285 = vadd.xlane.f32.xlu0 %v284
        %v286 = vpop.xlane.xlu0 %285
        %v287 = vsel %vm259, %v236, 0.0
        %288 = vadd.xlane.f32.xlu0 %v287
        %v289 = vpop.xlane.xlu0 %288
        %v290 = vsel %vm259, %v237, 0.0
        %291 = vadd.xlane.f32.xlu0 %v290
        %v292 = vpop.xlane.xlu0 %291
        %v293 = vsel %vm259, %v238, 0.0
        %294 = vadd.xlane.f32.xlu0 %v293
        %v295 = vpop.xlane.xlu0 %294
        %v296 = vsel %vm259, %v239, 0.0
        %297 = vadd.xlane.f32.xlu0 %v296
        %v298 = vpop.xlane.xlu0 %297
        %v299 = vsel %vm259, %v240, 0.0
        %300 = vadd.xlane.f32.xlu0 %v299
        %v301 = vpop.xlane.xlu0 %300
        %v302 = vsel %vm259, %v241, 0.0
        %303 = vadd.xlane.f32.xlu0 %v302
        %v304 = vpop.xlane.xlu0 %303
        %v305 = vsel %vm259, %v242, 0.0
        %306 = vadd.xlane.f32.xlu0 %v305
        %v307 = vpop.xlane.xlu0 %306
        %v308 = vsel %vm259, %v243, 0.0
        %309 = vadd.xlane.f32.xlu0 %v308
        %v310 = vpop.xlane.xlu0 %309
        %v311 = vsel %vm259, %v244, 0.0
        %312 = vadd.xlane.f32.xlu0 %v311
        %v313 = vpop.xlane.xlu0 %312
        %v314 = vsel %vm259, %v245, 0.0
        %315 = vadd.xlane.f32.xlu0 %v314
        %v316 = vpop.xlane.xlu0 %315
        %v317 = vsel %vm259, %v246, 0.0
        %318 = vadd.xlane.f32.xlu0 %v317
        %v319 = vpop.xlane.xlu0 %318
        %v320 = vsel %vm259, %v247, 0.0
        %321 = vadd.xlane.f32.xlu0 %v320
        %v322 = vpop.xlane.xlu0 %321
        %v323 = vsel %vm259, %v248, 0.0
        %324 = vadd.xlane.f32.xlu0 %v323
        %v325 = vpop.xlane.xlu0 %324
        %v326 = vsel %vm259, %v249, 0.0
        %327 = vadd.xlane.f32.xlu0 %v326
        %v328 = vpop.xlane.xlu0 %327
        %v329 = vsel %vm259, %v250, 0.0
        %330 = vadd.xlane.f32.xlu0 %v329
        %v331 = vpop.xlane.xlu0 %330
        %v332 = vsel %vm259, %v251, 0.0
        %333 = vadd.xlane.f32.xlu0 %v332
        %v334 = vpop.xlane.xlu0 %333
        %v335 = vsel %vm259, %v252, 0.0
        %336 = vadd.xlane.f32.xlu0 %v335
        %v337 = vpop.xlane.xlu0 %336
        %v338 = vsel %vm259, %v253, 0.0
        %339 = vadd.xlane.f32.xlu0 %v338
        %v340 = vpop.xlane.xlu0 %339
        %v341 = vsel %vm259, %v254, 0.0
        %342 = vadd.xlane.f32.xlu0 %v341
        %v343 = vpop.xlane.xlu0 %342
        %v344 = vsel %vm259, %v255, 0.0
        %345 = vadd.xlane.f32.xlu0 %v344
        %v346 = vpop.xlane.xlu0 %345
        %v347 = vsel %vm259, %v256, 0.0
        %348 = vadd.xlane.f32.xlu0 %v347
        %v349 = vpop.xlane.xlu0 %348
        %v350 = vsel %vm259, %v257, 0.0
        %351 = vadd.xlane.f32.xlu0 %v350
        %v352 = vpop.xlane.xlu0 %351
        %v353 = vsel %vm259, %v258, 0.0
        %354 = vadd.xlane.f32.xlu0 %v353
        %v355 = vpop.xlane.xlu0 %354
        %v356 = vrcp.pop 32.0
        %v357 = vmul.f32 %v262, %v356
        %v358 = vmul.f32 %v265, %v356
        %v359 = vmul.f32 %v268, %v356
        %v360 = vmul.f32 %v271, %v356
        %v361 = vmul.f32 %v274, %v356
        %v362 = vmul.f32 %v277, %v356
        %v363 = vmul.f32 %v280, %v356
        %v364 = vmul.f32 %v283, %v356
        %v365 = vmul.f32 %v286, %v356
        %v366 = vmul.f32 %v289, %v356
        %v367 = vmul.f32 %v292, %v356
        %v368 = vmul.f32 %v295, %v356
        %v369 = vmul.f32 %v298, %v356
        %v370 = vmul.f32 %v301, %v356
        %v371 = vmul.f32 %v304, %v356
        %v372 = vmul.f32 %v307, %v356
        %v373 = vmul.f32 %v310, %v356
        %v374 = vmul.f32 %v313, %v356
        %v375 = vmul.f32 %v316, %v356
        %v376 = vmul.f32 %v319, %v356
        %v377 = vmul.f32 %v322, %v356
        %v378 = vmul.f32 %v325, %v356
        %v379 = vmul.f32 %v328, %v356
        %v380 = vmul.f32 %v331, %v356
        %v381 = vmul.f32 %v334, %v356
        %v382 = vmul.f32 %v337, %v356
        %v383 = vmul.f32 %v340, %v356
        %v384 = vmul.f32 %v343, %v356
        %v385 = vmul.f32 %v346, %v356
        %v386 = vmul.f32 %v349, %v356
        %v387 = vmul.f32 %v352, %v356
        %v388 = vmul.f32 %v355, %v356
        %v389 = vsub.f32 %v227, %v357
        %v390 = vsub.f32 %v228, %v358
        %v391 = vsub.f32 %v229, %v359
        %v392 = vsub.f32 %v230, %v360
        %v393 = vsub.f32 %v231, %v361
        %v394 = vsub.f32 %v232, %v362
        %v395 = vsub.f32 %v233, %v363
        %v396 = vsub.f32 %v234, %v364
        %v397 = vsub.f32 %v235, %v365
        %v398 = vsub.f32 %v236, %v366
        %v399 = vsub.f32 %v237, %v367
        %v400 = vsub.f32 %v238, %v368
        %v401 = vsub.f32 %v239, %v369
        %v402 = vsub.f32 %v240, %v370
        %v403 = vsub.f32 %v241, %v371
        %v404 = vsub.f32 %v242, %v372
        %v405 = vsub.f32 %v243, %v373
        %v406 = vsub.f32 %v244, %v374
        %v407 = vsub.f32 %v245, %v375
        %v408 = vsub.f32 %v246, %v376
        %v409 = vsub.f32 %v247, %v377
        %v410 = vsub.f32 %v248, %v378
        %v411 = vsub.f32 %v249, %v379
        %v412 = vsub.f32 %v250, %v380
        %v413 = vsub.f32 %v251, %v381
        %v414 = vsub.f32 %v252, %v382
        %v415 = vsub.f32 %v253, %v383
        %v416 = vsub.f32 %v254, %v384
        %v417 = vsub.f32 %v255, %v385
        %v418 = vsub.f32 %v256, %v386
        %v419 = vsub.f32 %v257, %v387
        %v420 = vsub.f32 %v258, %v388
        %v421 = vmul.f32 %v389, %v389
        %v422 = vmul.f32 %v390, %v390
        %v423 = vmul.f32 %v391, %v391
        %v424 = vmul.f32 %v392, %v392
        %v425 = vmul.f32 %v393, %v393
        %v426 = vmul.f32 %v394, %v394
        %v427 = vmul.f32 %v395, %v395
        %v428 = vmul.f32 %v396, %v396
        %v429 = vmul.f32 %v397, %v397
        %v430 = vmul.f32 %v398, %v398
        %v431 = vmul.f32 %v399, %v399
        %v432 = vmul.f32 %v400, %v400
        %v433 = vmul.f32 %v401, %v401
        %v434 = vmul.f32 %v402, %v402
        %v435 = vmul.f32 %v403, %v403
        %v436 = vmul.f32 %v404, %v404
        %v437 = vmul.f32 %v405, %v405
        %v438 = vmul.f32 %v406, %v406
        %v439 = vmul.f32 %v407, %v407
        %v440 = vmul.f32 %v408, %v408
        %v441 = vmul.f32 %v409, %v409
        %v442 = vmul.f32 %v410, %v410
        %v443 = vmul.f32 %v411, %v411
        %v444 = vmul.f32 %v412, %v412
        %v445 = vmul.f32 %v413, %v413
        %v446 = vmul.f32 %v414, %v414
        %v447 = vmul.f32 %v415, %v415
        %v448 = vmul.f32 %v416, %v416
        %v449 = vmul.f32 %v417, %v417
        %v450 = vmul.f32 %v418, %v418
        %v451 = vmul.f32 %v419, %v419
        %v452 = vmul.f32 %v420, %v420
        %v453 = vsel %vm259, %v421, 0.0
        %454 = vadd.xlane.f32.xlu0 %v453
        %v455 = vpop.xlane.xlu0 %454
        %v456 = vsel %vm259, %v422, 0.0
        %457 = vadd.xlane.f32.xlu0 %v456
        %v458 = vpop.xlane.xlu0 %457
        %v459 = vsel %vm259, %v423, 0.0
        %460 = vadd.xlane.f32.xlu0 %v459
        %v461 = vpop.xlane.xlu0 %460
        %v462 = vsel %vm259, %v424, 0.0
        %463 = vadd.xlane.f32.xlu0 %v462
        %v464 = vpop.xlane.xlu0 %463
        %v465 = vsel %vm259, %v425, 0.0
        %466 = vadd.xlane.f32.xlu0 %v465
        %v467 = vpop.xlane.xlu0 %466
        %v468 = vsel %vm259, %v426, 0.0
        %469 = vadd.xlane.f32.xlu0 %v468
        %v470 = vpop.xlane.xlu0 %469
        %v471 = vsel %vm259, %v427, 0.0
        %472 = vadd.xlane.f32.xlu0 %v471
        %v473 = vpop.xlane.xlu0 %472
        %v474 = vsel %vm259, %v428, 0.0
        %475 = vadd.xlane.f32.xlu0 %v474
        %v476 = vpop.xlane.xlu0 %475
        %v477 = vsel %vm259, %v429, 0.0
        %478 = vadd.xlane.f32.xlu0 %v477
        %v479 = vpop.xlane.xlu0 %478
        %v480 = vsel %vm259, %v430, 0.0
        %481 = vadd.xlane.f32.xlu0 %v480
        %v482 = vpop.xlane.xlu0 %481
        %v483 = vsel %vm259, %v431, 0.0
        %484 = vadd.xlane.f32.xlu0 %v483
        %v485 = vpop.xlane.xlu0 %484
        %v486 = vsel %vm259, %v432, 0.0
        %487 = vadd.xlane.f32.xlu0 %v486
        %v488 = vpop.xlane.xlu0 %487
        %v489 = vsel %vm259, %v433, 0.0
        %490 = vadd.xlane.f32.xlu0 %v489
        %v491 = vpop.xlane.xlu0 %490
        %v492 = vsel %vm259, %v434, 0.0
        %493 = vadd.xlane.f32.xlu0 %v492
        %v494 = vpop.xlane.xlu0 %493
        %v495 = vsel %vm259, %v435, 0.0
        %496 = vadd.xlane.f32.xlu0 %v495
        %v497 = vpop.xlane.xlu0 %496
        %v498 = vsel %vm259, %v436, 0.0
        %499 = vadd.xlane.f32.xlu0 %v498
        %v500 = vpop.xlane.xlu0 %499
        %v501 = vsel %vm259, %v437, 0.0
        %502 = vadd.xlane.f32.xlu0 %v501
        %v503 = vpop.xlane.xlu0 %502
        %v504 = vsel %vm259, %v438, 0.0
        %505 = vadd.xlane.f32.xlu0 %v504
        %v506 = vpop.xlane.xlu0 %505
        %v507 = vsel %vm259, %v439, 0.0
        %508 = vadd.xlane.f32.xlu0 %v507
        %v509 = vpop.xlane.xlu0 %508
        %v510 = vsel %vm259, %v440, 0.0
        %511 = vadd.xlane.f32.xlu0 %v510
        %v512 = vpop.xlane.xlu0 %511
        %v513 = vsel %vm259, %v441, 0.0
        %514 = vadd.xlane.f32.xlu0 %v513
        %v515 = vpop.xlane.xlu0 %514
        %v516 = vsel %vm259, %v442, 0.0
        %517 = vadd.xlane.f32.xlu0 %v516
        %v518 = vpop.xlane.xlu0 %517
        %v519 = vsel %vm259, %v443, 0.0
        %520 = vadd.xlane.f32.xlu0 %v519
        %v521 = vpop.xlane.xlu0 %520
        %v522 = vsel %vm259, %v444, 0.0
        %523 = vadd.xlane.f32.xlu0 %v522
        %v524 = vpop.xlane.xlu0 %523
        %v525 = vsel %vm259, %v445, 0.0
        %526 = vadd.xlane.f32.xlu0 %v525
        %v527 = vpop.xlane.xlu0 %526
        %v528 = vsel %vm259, %v446, 0.0
        %529 = vadd.xlane.f32.xlu0 %v528
        %v530 = vpop.xlane.xlu0 %529
        %v531 = vsel %vm259, %v447, 0.0
        %532 = vadd.xlane.f32.xlu0 %v531
        %v533 = vpop.xlane.xlu0 %532
        %v534 = vsel %vm259, %v448, 0.0
        %535 = vadd.xlane.f32.xlu0 %v534
        %v536 = vpop.xlane.xlu0 %535
        %v537 = vsel %vm259, %v449, 0.0
        %538 = vadd.xlane.f32.xlu0 %v537
        %v539 = vpop.xlane.xlu0 %538
        %v540 = vsel %vm259, %v450, 0.0
        %541 = vadd.xlane.f32.xlu0 %v540
        %v542 = vpop.xlane.xlu0 %541
        %v543 = vsel %vm259, %v451, 0.0
        %544 = vadd.xlane.f32.xlu0 %v543
        %v545 = vpop.xlane.xlu0 %544
        %v546 = vsel %vm259, %v452, 0.0
        %547 = vadd.xlane.f32.xlu0 %v546
        %v548 = vpop.xlane.xlu0 %547
        %v549 = vmul.f32 %v455, %v356
        %v550 = vmul.f32 %v458, %v356
        %v551 = vmul.f32 %v461, %v356
        %v552 = vmul.f32 %v464, %v356
        %v553 = vmul.f32 %v467, %v356
        %v554 = vmul.f32 %v470, %v356
        %v555 = vmul.f32 %v473, %v356
        %v556 = vmul.f32 %v476, %v356
        %v557 = vmul.f32 %v479, %v356
        %v558 = vmul.f32 %v482, %v356
        %v559 = vmul.f32 %v485, %v356
        %v560 = vmul.f32 %v488, %v356
        %v561 = vmul.f32 %v491, %v356
        %v562 = vmul.f32 %v494, %v356
        %v563 = vmul.f32 %v497, %v356
        %v564 = vmul.f32 %v500, %v356
        %v565 = vmul.f32 %v503, %v356
        %v566 = vmul.f32 %v506, %v356
        %v567 = vmul.f32 %v509, %v356
        %v568 = vmul.f32 %v512, %v356
        %v569 = vmul.f32 %v515, %v356
        %v570 = vmul.f32 %v518, %v356
        %v571 = vmul.f32 %v521, %v356
        %v572 = vmul.f32 %v524, %v356
        %v573 = vmul.f32 %v527, %v356
        %v574 = vmul.f32 %v530, %v356
        %v575 = vmul.f32 %v533, %v356
        %v576 = vmul.f32 %v536, %v356
        %v577 = vmul.f32 %v539, %v356
        %v578 = vmul.f32 %v542, %v356
        %v579 = vmul.f32 %v545, %v356
        %v580 = vmul.f32 %v548, %v356
        %v581 = vadd.f32 %v549, 1e-05
        %v582 = vadd.f32 %v550, 1e-05
        %v583 = vadd.f32 %v551, 1e-05
        %v584 = vadd.f32 %v552, 1e-05
        %v585 = vadd.f32 %v553, 1e-05
        %v586 = vadd.f32 %v554, 1e-05
        %v587 = vadd.f32 %v555, 1e-05
        %v588 = vadd.f32 %v556, 1e-05
        %v589 = vadd.f32 %v557, 1e-05
        %v590 = vadd.f32 %v558, 1e-05
        %v591 = vadd.f32 %v559, 1e-05
        %v592 = vadd.f32 %v560, 1e-05
        %v593 = vadd.f32 %v561, 1e-05
        %v594 = vadd.f32 %v562, 1e-05
        %v595 = vadd.f32 %v563, 1e-05
        %v596 = vadd.f32 %v564, 1e-05
        %v597 = vadd.f32 %v565, 1e-05
        %v598 = vadd.f32 %v566, 1e-05
        %v599 = vadd.f32 %v567, 1e-05
        %v600 = vadd.f32 %v568, 1e-05
        %v601 = vadd.f32 %v569, 1e-05
        %v602 = vadd.f32 %v570, 1e-05
        %v603 = vadd.f32 %v571, 1e-05
        %v604 = vadd.f32 %v572, 1e-05
        %v605 = vadd.f32 %v573, 1e-05
        %v606 = vadd.f32 %v574, 1e-05
        %v607 = vadd.f32 %v575, 1e-05
        %v608 = vadd.f32 %v576, 1e-05
        %v609 = vadd.f32 %v577, 1e-05
        %v610 = vadd.f32 %v578, 1e-05
        %v611 = vadd.f32 %v579, 1e-05
        %v612 = vadd.f32 %v580, 1e-05
        %v613 = vrsqrt.pop %v581
        %v614 = vrsqrt.pop %v582
        %v615 = vrsqrt.pop %v583
        %v616 = vrsqrt.pop %v584
        %v617 = vrsqrt.pop %v585
        %v618 = vrsqrt.pop %v586
        %v619 = vrsqrt.pop %v587
        %v620 = vrsqrt.pop %v588
        %v621 = vrsqrt.pop %v589
        %v622 = vrsqrt.pop %v590
        %v623 = vrsqrt.pop %v591
        %v624 = vrsqrt.pop %v592
        %v625 = vrsqrt.pop %v593
        %v626 = vrsqrt.pop %v594
        %v627 = vrsqrt.pop %v595
        %v628 = vrsqrt.pop %v596
        %v629 = vrsqrt.pop %v597
        %v630 = vrsqrt.pop %v598
        %v631 = vrsqrt.pop %v599
        %v632 = vrsqrt.pop %v600
        %v633 = vrsqrt.pop %v601
        %v634 = vrsqrt.pop %v602
        %v635 = vrsqrt.pop %v603
        %v636 = vrsqrt.pop %v604
        %v637 = vrsqrt.pop %v605
        %v638 = vrsqrt.pop %v606
        %v639 = vrsqrt.pop %v607
        %v640 = vrsqrt.pop %v608
        %v641 = vrsqrt.pop %v609
        %v642 = vrsqrt.pop %v610
        %v643 = vrsqrt.pop %v611
        %v644 = vrsqrt.pop %v612
        %v645 = vmul.f32 %v389, %v613
        %v646 = vmul.f32 %v390, %v614
        %v647 = vmul.f32 %v391, %v615
        %v648 = vmul.f32 %v392, %v616
        %v649 = vmul.f32 %v393, %v617
        %v650 = vmul.f32 %v394, %v618
        %v651 = vmul.f32 %v395, %v619
        %v652 = vmul.f32 %v396, %v620
        %v653 = vmul.f32 %v397, %v621
        %v654 = vmul.f32 %v398, %v622
        %v655 = vmul.f32 %v399, %v623
        %v656 = vmul.f32 %v400, %v624
        %v657 = vmul.f32 %v401, %v625
        %v658 = vmul.f32 %v402, %v626
        %v659 = vmul.f32 %v403, %v627
        %v660 = vmul.f32 %v404, %v628
        %v661 = vmul.f32 %v405, %v629
        %v662 = vmul.f32 %v406, %v630
        %v663 = vmul.f32 %v407, %v631
        %v664 = vmul.f32 %v408, %v632
        %v665 = vmul.f32 %v409, %v633
        %v666 = vmul.f32 %v410, %v634
        %v667 = vmul.f32 %v411, %v635
        %v668 = vmul.f32 %v412, %v636
        %v669 = vmul.f32 %v413, %v637
        %v670 = vmul.f32 %v414, %v638
        %v671 = vmul.f32 %v415, %v639
        %v672 = vmul.f32 %v416, %v640
        %v673 = vmul.f32 %v417, %v641
        %v674 = vmul.f32 %v418, %v642
        %v675 = vmul.f32 %v419, %v643
        %v676 = vmul.f32 %v420, %v644
        %v677 = vld [vmem:[%s1] sm:$0x1]
        %v679 = vlaneseq
        %v680 = vshrl.u32 %v679, 7
        %v681 = vsub.s32 0, %v680
        %v682 = vrot.slane %v677, %v681
        %v684 = vmul.f32 %v645, %v682
        %v685 = vmul.f32 %v646, %v682
        %v686 = vmul.f32 %v647, %v682
        %v687 = vmul.f32 %v648, %v682
        %v688 = vmul.f32 %v649, %v682
        %v689 = vmul.f32 %v650, %v682
        %v690 = vmul.f32 %v651, %v682
        %v691 = vmul.f32 %v652, %v682
        %v692 = vmul.f32 %v653, %v682
        %v693 = vmul.f32 %v654, %v682
        %v694 = vmul.f32 %v655, %v682
        %v695 = vmul.f32 %v656, %v682
        %v696 = vmul.f32 %v657, %v682
        %v697 = vmul.f32 %v658, %v682
        %v698 = vmul.f32 %v659, %v682
        %v699 = vmul.f32 %v660, %v682
        %v700 = vmul.f32 %v661, %v682
        %v701 = vmul.f32 %v662, %v682
        %v702 = vmul.f32 %v663, %v682
        %v703 = vmul.f32 %v664, %v682
        %v704 = vmul.f32 %v665, %v682
        %v705 = vmul.f32 %v666, %v682
        %v706 = vmul.f32 %v667, %v682
        %v707 = vmul.f32 %v668, %v682
        %v708 = vmul.f32 %v669, %v682
        %v709 = vmul.f32 %v670, %v682
        %v710 = vmul.f32 %v671, %v682
        %v711 = vmul.f32 %v672, %v682
        %v712 = vmul.f32 %v673, %v682
        %v713 = vmul.f32 %v674, %v682
        %v714 = vmul.f32 %v675, %v682
        %v715 = vmul.f32 %v676, %v682
        %v716 = vld [vmem:[%s2] sm:$0x1]
        %v718 = vlaneseq
        %v719 = vshrl.u32 %v718, 7
        %v720 = vsub.s32 0, %v719
        %v721 = vrot.slane %v716, %v720
        %v723 = vadd.f32 %v684, %v721
        %v724 = vadd.f32 %v685, %v721
        %v725 = vadd.f32 %v686, %v721
        %v726 = vadd.f32 %v687, %v721
        %v727 = vadd.f32 %v688, %v721
        %v728 = vadd.f32 %v689, %v721
        %v729 = vadd.f32 %v690, %v721
        %v730 = vadd.f32 %v691, %v721
        %v731 = vadd.f32 %v692, %v721
        %v732 = vadd.f32 %v693, %v721
        %v733 = vadd.f32 %v694, %v721
        %v734 = vadd.f32 %v695, %v721
        %v735 = vadd.f32 %v696, %v721
        %v736 = vadd.f32 %v697, %v721
        %v737 = vadd.f32 %v698, %v721
        %v738 = vadd.f32 %v699, %v721
        %v739 = vadd.f32 %v700, %v721
        %v740 = vadd.f32 %v701, %v721
        %v741 = vadd.f32 %v702, %v721
        %v742 = vadd.f32 %v703, %v721
        %v743 = vadd.f32 %v704, %v721
        %v744 = vadd.f32 %v705, %v721
        %v745 = vadd.f32 %v706, %v721
        %v746 = vadd.f32 %v707, %v721
        %v747 = vadd.f32 %v708, %v721
        %v748 = vadd.f32 %v709, %v721
        %v749 = vadd.f32 %v710, %v721
        %v750 = vadd.f32 %v711, %v721
        %v751 = vadd.f32 %v712, %v721
        %v752 = vadd.f32 %v713, %v721
        %v753 = vadd.f32 %v714, %v721
        %v754 = vadd.f32 %v715, %v721
        %v755 = vpack.c.bf16 %v724, %v723
        %v756 = vpack.c.bf16 %v726, %v725
        %v757 = vpack.c.bf16 %v728, %v727
        %v758 = vpack.c.bf16 %v730, %v729
        %v759 = vpack.c.bf16 %v732, %v731
        %v760 = vpack.c.bf16 %v734, %v733
        %v761 = vpack.c.bf16 %v736, %v735
        %v762 = vpack.c.bf16 %v738, %v737
        %v763 = vpack.c.bf16 %v740, %v739
        %v764 = vpack.c.bf16 %v742, %v741
        %v765 = vpack.c.bf16 %v744, %v743
        %v766 = vpack.c.bf16 %v746, %v745
        %v767 = vpack.c.bf16 %v748, %v747
        %v768 = vpack.c.bf16 %v750, %v749
        %v769 = vpack.c.bf16 %v752, %v751
        %v770 = vpack.c.bf16 %v754, %v753
        %v771 = vld [vmem:[%s3] sm:$0xf]
        %v772 = vld [vmem:[%s3 + $0x4] sm:$0xf]
        %v773 = vld [vmem:[%s3 + $0x8] sm:$0xf]
        %v774 = vld [vmem:[%s3 + $0xc] sm:$0xf]
        %v775 = vld [vmem:[%s4] sm:$0x1]
        %v777 = vlaneseq
        %v778 = vshrl.u32 %v777, 7
        %v779 = vsub.s32 0, %v778
        %v780 = vrot.slane %v775, %v779
        %v786 = vunpack.c.l.b16 %v771
        %v787 = vunpack.c.l.b16 %v772
        %v788 = vunpack.c.l.b16 %v773
        %v789 = vunpack.c.l.b16 %v774
        %v790 = vpack.c.b16 %v787, %v786
        %v791 = vpack.c.b16 %v789, %v788
        %v795 = vsel %vm259, %v755, 0
        %v798 = vsel %vm259, %v756, 0
        %v801 = vsel %vm259, %v757, 0
        %v804 = vsel %vm259, %v758, 0
        %v807 = vsel %vm259, %v759, 0
        %v810 = vsel %vm259, %v760, 0
        %v813 = vsel %vm259, %v761, 0
        %v816 = vsel %vm259, %v762, 0
        %v819 = vsel %vm259, %v763, 0
        %v822 = vsel %vm259, %v764, 0
        %v825 = vsel %vm259, %v765, 0
        %v828 = vsel %vm259, %v766, 0
        %v831 = vsel %vm259, %v767, 0
        %v834 = vsel %vm259, %v768, 0
        %v837 = vsel %vm259, %v769, 0
        %v840 = vsel %vm259, %v770, 0
        %842 = vmatprep.subr.bf16.mxu0 0
        %843 = vmatpush1.bf16.msra.mxu0 %v790
        %844 = vmatprep.subr.bf16.mxu0 0
        %845 = vmatpush1.bf16.msra.mxu0 %v791
        %846 = vmatprep.subr.bf16.mxu0 0
        %847 = vmatpush1.bf16.msra.mxu0 0
        %848 = vmatprep.subr.bf16.mxu0 0
        %849 = vmatpush1.bf16.msra.mxu0 0
        %850 = vmatprep.subr.bf16.mxu0 0
        %851 = vmatpush1.bf16.msra.mxu0 0
        %852 = vmatprep.subr.bf16.mxu0 0
        %853 = vmatpush1.bf16.msra.mxu0 0
        %854 = vmatprep.subr.bf16.mxu0 0
        %855 = vmatpush1.bf16.msra.mxu0 0
        %856 = vmatprep.subr.bf16.mxu0 0
        %857 = vmatpush1.bf16.msra.mxu0 0
        %858 = vmatprep.subr.bf16.mxu0 0
        %859 = vmatpush1.bf16.msra.mxu0 0
        %860 = vmatprep.subr.bf16.mxu0 0
        %861 = vmatpush1.bf16.msra.mxu0 0
        %862 = vmatprep.subr.bf16.mxu0 0
        %863 = vmatpush1.bf16.msra.mxu0 0
        %864 = vmatprep.subr.bf16.mxu0 0
        %865 = vmatpush1.bf16.msra.mxu0 0
        %866 = vmatprep.subr.bf16.mxu0 0
        %867 = vmatpush1.bf16.msra.mxu0 0
        %868 = vmatprep.subr.bf16.mxu0 0
        %869 = vmatpush1.bf16.msra.mxu0 0
        %870 = vmatprep.subr.bf16.mxu0 0
        %871 = vmatpush1.bf16.msra.mxu0 0
        %872 = vmatprep.subr.bf16.mxu0 0
        %873 = vmatpush1.bf16.msra.mxu0 0
        %874 = vmatprep.mubr.bf16.mxu0 0
        %875 = vmatmul.mubr.bf16.gmra.mrb[0].mxu0 %v795
        %v876 = vpop.f32.mrb[0].mxu0
        %v877 = vadd.f32 %v780, %v876
        %v878 = vpop.f32.mrb[0].mxu0
        %v879 = vpop.f32.mrb[0].mxu0
        %v880 = vadd.f32 %v780, %v879
        %v881 = vpop.f32.mrb[0].mxu0
        %882 = vmatprep.mubr.bf16.mxu0 0
        %883 = vmatmul.mubr.bf16.gmra.mrb[0].mxu0 %v798
        %v884 = vpop.f32.mrb[0].mxu0
        %v885 = vadd.f32 %v780, %v884
        %v886 = vpop.f32.mrb[0].mxu0
        %v887 = vpop.f32.mrb[0].mxu0
        %v888 = vadd.f32 %v780, %v887
        %v889 = vpop.f32.mrb[0].mxu0
        %890 = vmatprep.mubr.bf16.mxu0 0
        %891 = vmatmul.mubr.bf16.gmra.mrb[0].mxu0 %v801
        %v892 = vpop.f32.mrb[0].mxu0
        %v893 = vadd.f32 %v780, %v892
        %v894 = vpop.f32.mrb[0].mxu0
        %v895 = vpop.f32.mrb[0].mxu0
        %v896 = vadd.f32 %v780, %v895
        %v897 = vpop.f32.mrb[0].mxu0
        %898 = vmatprep.mubr.bf16.mxu0 0
        %899 = vmatmul.mubr.bf16.gmra.mrb[0].mxu0 %v804
        %v900 = vpop.f32.mrb[0].mxu0
        %v901 = vadd.f32 %v780, %v900
        %v902 = vpop.f32.mrb[0].mxu0
        %v903 = vpop.f32.mrb[0].mxu0
        %v904 = vadd.f32 %v780, %v903
        %v905 = vpop.f32.mrb[0].mxu0
        %906 = vmatprep.mubr.bf16.mxu0 0
        %907 = vmatmul.mubr.bf16.gmra.mrb[0].mxu0 %v807
        %v908 = vpop.f32.mrb[0].mxu0
        %v909 = vadd.f32 %v780, %v908
        %v910 = vpop.f32.mrb[0].mxu0
        %v911 = vpop.f32.mrb[0].mxu0
        %v912 = vadd.f32 %v780, %v911
        %v913 = vpop.f32.mrb[0].mxu0
        %914 = vmatprep.mubr.bf16.mxu0 0
        %915 = vmatmul.mubr.bf16.gmra.mrb[0].mxu0 %v810
        %v916 = vpop.f32.mrb[0].mxu0
        %v917 = vadd.f32 %v780, %v916
        %v918 = vpop.f32.mrb[0].mxu0
        %v919 = vpop.f32.mrb[0].mxu0
        %v920 = vadd.f32 %v780, %v919
        %v921 = vpop.f32.mrb[0].mxu0
        %922 = vmatprep.mubr.bf16.mxu0 0
        %923 = vmatmul.mubr.bf16.gmra.mrb[0].mxu0 %v813
        %v924 = vpop.f32.mrb[0].mxu0
        %v925 = vadd.f32 %v780, %v924
        %v926 = vpop.f32.mrb[0].mxu0
        %v927 = vpop.f32.mrb[0].mxu0
        %v928 = vadd.f32 %v780, %v927
        %v929 = vpop.f32.mrb[0].mxu0
        %930 = vmatprep.mubr.bf16.mxu0 0
        %931 = vmatmul.mubr.bf16.gmra.mrb[0].mxu0 %v816
        %v932 = vpop.f32.mrb[0].mxu0
        %v933 = vadd.f32 %v780, %v932
        %v934 = vpop.f32.mrb[0].mxu0
        %v935 = vpop.f32.mrb[0].mxu0
        %v936 = vadd.f32 %v780, %v935
        %v937 = vpop.f32.mrb[0].mxu0
        %938 = vmatprep.mubr.bf16.mxu0 0
        %939 = vmatmul.mubr.bf16.gmra.mrb[0].mxu0 %v819
        %v940 = vpop.f32.mrb[0].mxu0
        %v941 = vadd.f32 %v780, %v940
        %v942 = vpop.f32.mrb[0].mxu0
        %v943 = vpop.f32.mrb[0].mxu0
        %v944 = vadd.f32 %v780, %v943
        %v945 = vpop.f32.mrb[0].mxu0
        %946 = vmatprep.mubr.bf16.mxu0 0
        %947 = vmatmul.mubr.bf16.gmra.mrb[0].mxu0 %v822
        %v948 = vpop.f32.mrb[0].mxu0
        %v949 = vadd.f32 %v780, %v948
        %v950 = vpop.f32.mrb[0].mxu0
        %v951 = vpop.f32.mrb[0].mxu0
        %v952 = vadd.f32 %v780, %v951
        %v953 = vpop.f32.mrb[0].mxu0
        %954 = vmatprep.mubr.bf16.mxu0 0
        %955 = vmatmul.mubr.bf16.gmra.mrb[0].mxu0 %v825
        %v956 = vpop.f32.mrb[0].mxu0
        %v957 = vadd.f32 %v780, %v956
        %v958 = vpop.f32.mrb[0].mxu0
        %v959 = vpop.f32.mrb[0].mxu0
        %v960 = vadd.f32 %v780, %v959
        %v961 = vpop.f32.mrb[0].mxu0
        %962 = vmatprep.mubr.bf16.mxu0 0
        %963 = vmatmul.mubr.bf16.gmra.mrb[0].mxu0 %v828
        %v964 = vpop.f32.mrb[0].mxu0
        %v965 = vadd.f32 %v780, %v964
        %v966 = vpop.f32.mrb[0].mxu0
        %v967 = vpop.f32.mrb[0].mxu0
        %v968 = vadd.f32 %v780, %v967
        %v969 = vpop.f32.mrb[0].mxu0
        %970 = vmatprep.mubr.bf16.mxu0 0
        %971 = vmatmul.mubr.bf16.gmra.mrb[0].mxu0 %v831
        %v972 = vpop.f32.mrb[0].mxu0
        %v973 = vadd.f32 %v780, %v972
        %v974 = vpop.f32.mrb[0].mxu0
        %v975 = vpop.f32.mrb[0].mxu0
        %v976 = vadd.f32 %v780, %v975
        %v977 = vpop.f32.mrb[0].mxu0
        %978 = vmatprep.mubr.bf16.mxu0 0
        %979 = vmatmul.mubr.bf16.gmra.mrb[0].mxu0 %v834
        %v980 = vpop.f32.mrb[0].mxu0
        %v981 = vadd.f32 %v780, %v980
        %v982 = vpop.f32.mrb[0].mxu0
        %v983 = vpop.f32.mrb[0].mxu0
        %v984 = vadd.f32 %v780, %v983
        %v985 = vpop.f32.mrb[0].mxu0
        %986 = vmatprep.mubr.bf16.mxu0 0
        %987 = vmatmul.mubr.bf16.gmra.mrb[0].mxu0 %v837
        %v988 = vpop.f32.mrb[0].mxu0
        %v989 = vadd.f32 %v780, %v988
        %v990 = vpop.f32.mrb[0].mxu0
        %v991 = vpop.f32.mrb[0].mxu0
        %v992 = vadd.f32 %v780, %v991
        %v993 = vpop.f32.mrb[0].mxu0
        %994 = vmatprep.mubr.bf16.mxu0 0
        %995 = vmatmul.mubr.bf16.gmra.mrb[0].mxu0 %v840
        %v996 = vpop.f32.mrb[0].mxu0
        %v997 = vadd.f32 %v780, %v996
        %v998 = vpop.f32.mrb[0].mxu0
        %v999 = vpop.f32.mrb[0].mxu0
        %v1000 = vadd.f32 %v780, %v999
        %v1001 = vpop.f32.mrb[0].mxu0
        %1002 = vdwg.mxu0
        %v1003 = vpack.c.bf16 %v880, %v877
        %v1004 = vpack.c.bf16 %v888, %v885
        %v1005 = vpack.c.bf16 %v896, %v893
        %v1006 = vpack.c.bf16 %v904, %v901
        %v1007 = vpack.c.bf16 %v912, %v909
        %v1008 = vpack.c.bf16 %v920, %v917
        %v1009 = vpack.c.bf16 %v928, %v925
        %v1010 = vpack.c.bf16 %v936, %v933
        %v1011 = vpack.c.bf16 %v944, %v941
        %v1012 = vpack.c.bf16 %v952, %v949
        %v1013 = vpack.c.bf16 %v960, %v957
        %v1014 = vpack.c.bf16 %v968, %v965
        %v1015 = vpack.c.bf16 %v976, %v973
        %v1016 = vpack.c.bf16 %v984, %v981
        %v1017 = vpack.c.bf16 %v992, %v989
        %v1018 = vpack.c.bf16 %v1000, %v997
        %v1035 = vunpack.c.l.b16 %v1003
        %v1036 = vunpack.c.h.b16 %v1003
        %v1037 = vunpack.c.l.b16 %v1004
        %v1038 = vunpack.c.h.b16 %v1004
        %v1039 = vunpack.c.l.b16 %v1005
        %v1040 = vunpack.c.h.b16 %v1005
        %v1041 = vunpack.c.l.b16 %v1006
        %v1042 = vunpack.c.h.b16 %v1006
        %v1043 = vunpack.c.l.b16 %v1007
        %v1044 = vunpack.c.h.b16 %v1007
        %v1045 = vunpack.c.l.b16 %v1008
        %v1046 = vunpack.c.h.b16 %v1008
        %v1047 = vunpack.c.l.b16 %v1009
        %v1048 = vunpack.c.h.b16 %v1009
        %v1049 = vunpack.c.l.b16 %v1010
        %v1050 = vunpack.c.h.b16 %v1010
        %v1051 = vunpack.c.l.b16 %v1011
        %v1052 = vunpack.c.h.b16 %v1011
        %v1053 = vunpack.c.l.b16 %v1012
        %v1054 = vunpack.c.h.b16 %v1012
        %v1055 = vunpack.c.l.b16 %v1013
        %v1056 = vunpack.c.h.b16 %v1013
        %v1057 = vunpack.c.l.b16 %v1014
        %v1058 = vunpack.c.h.b16 %v1014
        %v1059 = vunpack.c.l.b16 %v1015
        %v1060 = vunpack.c.h.b16 %v1015
        %v1061 = vunpack.c.l.b16 %v1016
        %v1062 = vunpack.c.h.b16 %v1016
        %v1063 = vunpack.c.l.b16 %v1017
        %v1064 = vunpack.c.h.b16 %v1017
        %v1065 = vunpack.c.l.b16 %v1018
        %v1066 = vunpack.c.h.b16 %v1018
        %v1067 = vpack.c.b16 %v1035, %v1035
        %v1068 = vpack.c.b16 %v1036, %v1036
        %v1069 = vpack.c.b16 %v1037, %v1037
        %v1070 = vpack.c.b16 %v1038, %v1038
        %v1071 = vpack.c.b16 %v1039, %v1039
        %v1072 = vpack.c.b16 %v1040, %v1040
        %v1073 = vpack.c.b16 %v1041, %v1041
        %v1074 = vpack.c.b16 %v1042, %v1042
        %v1075 = vpack.c.b16 %v1043, %v1043
        %v1076 = vpack.c.b16 %v1044, %v1044
        %v1077 = vpack.c.b16 %v1045, %v1045
        %v1078 = vpack.c.b16 %v1046, %v1046
        %v1079 = vpack.c.b16 %v1047, %v1047
        %v1080 = vpack.c.b16 %v1048, %v1048
        %v1081 = vpack.c.b16 %v1049, %v1049
        %v1082 = vpack.c.b16 %v1050, %v1050
        %v1083 = vpack.c.b16 %v1051, %v1051
        %v1084 = vpack.c.b16 %v1052, %v1052
        %v1085 = vpack.c.b16 %v1053, %v1053
        %v1086 = vpack.c.b16 %v1054, %v1054
        %v1087 = vpack.c.b16 %v1055, %v1055
        %v1088 = vpack.c.b16 %v1056, %v1056
        %v1089 = vpack.c.b16 %v1057, %v1057
        %v1090 = vpack.c.b16 %v1058, %v1058
        %v1091 = vpack.c.b16 %v1059, %v1059
        %v1092 = vpack.c.b16 %v1060, %v1060
        %v1093 = vpack.c.b16 %v1061, %v1061
        %v1094 = vpack.c.b16 %v1062, %v1062
        %v1095 = vpack.c.b16 %v1063, %v1063
        %v1096 = vpack.c.b16 %v1064, %v1064
        %v1097 = vpack.c.b16 %v1065, %v1065
        %v1098 = vpack.c.b16 %v1066, %v1066
        %1131 = vst [vmem:[%s218] sm:$0xf] %v1067
        %1132 = vst [vmem:[%s218 + $0x4] sm:$0xf] %v1068
        %1133 = vst [vmem:[%s218 + $0x8] sm:$0xf] %v1069
        %1134 = vst [vmem:[%s218 + $0xc] sm:$0xf] %v1070
        %1135 = vst [vmem:[%s218 + $0x10] sm:$0xf] %v1071
        %1136 = vst [vmem:[%s218 + $0x14] sm:$0xf] %v1072
        %1137 = vst [vmem:[%s218 + $0x18] sm:$0xf] %v1073
        %1138 = vst [vmem:[%s218 + $0x1c] sm:$0xf] %v1074
        %1139 = vst [vmem:[%s218 + $0x20] sm:$0xf] %v1075
        %1140 = vst [vmem:[%s218 + $0x24] sm:$0xf] %v1076
        %1141 = vst [vmem:[%s218 + $0x28] sm:$0xf] %v1077
        %1142 = vst [vmem:[%s218 + $0x2c] sm:$0xf] %v1078
        %1143 = vst [vmem:[%s218 + $0x30] sm:$0xf] %v1079
        %1144 = vst [vmem:[%s218 + $0x34] sm:$0xf] %v1080
        %1145 = vst [vmem:[%s218 + $0x38] sm:$0xf] %v1081
        %1146 = vst [vmem:[%s218 + $0x3c] sm:$0xf] %v1082
        %1147 = vst [vmem:[%s218 + $0x40] sm:$0xf] %v1083
        %1148 = vst [vmem:[%s218 + $0x44] sm:$0xf] %v1084
        %1149 = vst [vmem:[%s218 + $0x48] sm:$0xf] %v1085
        %1150 = vst [vmem:[%s218 + $0x4c] sm:$0xf] %v1086
        %1151 = vst [vmem:[%s218 + $0x50] sm:$0xf] %v1087
        %1152 = vst [vmem:[%s218 + $0x54] sm:$0xf] %v1088
        %1153 = vst [vmem:[%s218 + $0x58] sm:$0xf] %v1089
        %1154 = vst [vmem:[%s218 + $0x5c] sm:$0xf] %v1090
        %1155 = vst [vmem:[%s218 + $0x60] sm:$0xf] %v1091
        %1156 = vst [vmem:[%s218 + $0x64] sm:$0xf] %v1092
        %1157 = vst [vmem:[%s218 + $0x68] sm:$0xf] %v1093
        %1158 = vst [vmem:[%s218 + $0x6c] sm:$0xf] %v1094
        %1159 = vst [vmem:[%s218 + $0x70] sm:$0xf] %v1095
        %1160 = vst [vmem:[%s218 + $0x74] sm:$0xf] %v1096
        %1161 = vst [vmem:[%s218 + $0x78] sm:$0xf] %v1097
        %1162 = vst [vmem:[%s218 + $0x7c] sm:$0xf] %v1098
        %s1163 = sand.u32 %s137, 1
        %s1164 = scalar_lea.sflag [#allocation3], %s1163
        %s1165 = sand.u32 %s137, 1
        %s1166 = smul.addr %s1165, 128
        %s1167 = scalar_lea.vmem [#allocation2], %s1166
        // Predicated region
        $region41: #{tpu_custom_call.1} parent=39 // pred_check
          %p1168 = pneg %p147
        $region42: #{tpu_custom_call.1} parent=39 // pred_check_branch
          %1170 = sbr.rel (%p1168) target = $region44
        $region43: #{tpu_custom_call.1} parent=39 // pred_region
          %s1171 = smul.u32 32, %s19
          %s1173 = ssub.s32 2048, 2048
          %1174 = vsyncadd %s1164, %s1173
          %s1175 = smul.addr %s1171, 64
          %s1176 = scalar_lea.hbm %s5, %s1175
          %s1177 = sshll.u32 %s1167, 4
          %s1178 = int_to_ptr.vmem [resolvable:$true] %s1177
          %1183 = dma.vmem_to_hbm [thread:$0]  %s1178, 2048, %s1176, %s1164, 64, 64, 4
        $region44: #{tpu_custom_call.1} parent=39 // pred_fallthru
          _
      $region40: #{tpu_custom_call.1} parent=5 // pred_fallthru
        _
      %p1184 = scmp.le.s32.totalorder 2, %s14
      // Predicated region
      $region45: #{tpu_custom_call.1} parent=5 // pred_check
        %p1185 = pneg %p1184
      $region46: #{tpu_custom_call.1} parent=5 // pred_check_branch
        %1187 = sbr.rel (%p1185) target = $region48
      $region47: #{tpu_custom_call.1} parent=5 // pred_region
        %s1188 = ssub.s32 %s14, 2
        // Predicated region
        $region49: #{tpu_custom_call.1} parent=47 // pred_check
          %p1189 = pneg %p153
        $region50: #{tpu_custom_call.1} parent=47 // pred_check_branch
          %1191 = sbr.rel (%p1189) target = $region52
        $region51: #{tpu_custom_call.1} parent=47 // pred_region
          %s1192 = sand.u32 %s138, 1
          %s1193 = scalar_lea.sflag [#allocation3], %s1192
          %s1194 = sand.u32 %s138, 1
          %s1195 = smul.addr %s1194, 128
          %s1196 = scalar_lea.vmem [#allocation2], %s1195
          %1197 = dma.done %s1193, 2048
        $region52: #{tpu_custom_call.1} parent=47 // pred_fallthru
          _
      $region48: #{tpu_custom_call.1} parent=5 // pred_fallthru
        _
    $region6: #{tpu_custom_call.1} parent=1 // loop_footer
      %s18 = sadd.s32 1, %s14
    $region7: #{tpu_custom_call.1} parent=1 // loop_footer_branch
      %13 = sbr.rel target = $region3
    $region8: #{tpu_custom_call.1} parent=1 // loop_exit
      _
    %1198 = vsyncpa [#allocation3], 1
    %s1199 = scalar_lea.sflag [#allocation3], 1
    %1200 = vsyncpa %s1199, 1

</llo_original>
